<compile_context>
chip_gen: v6e
topology: v6e:2x2x1
jax: 0.10.0
libtpu: 0.0.40
codegen_flags: <defaults>
</compile_context>

<pallas_src>
import numpy as np
import jax
import jax.numpy as jnp
from jax import lax
from jax.experimental import pallas as pl
from jax.experimental.pallas import tpu as pltpu

# Small stand-in for the module's IMAGE_SIZE = 100 (same structure: fc1 input
# is 32 * (IMAGE_SIZE // 4) ** 2).
IMAGE_SIZE = 16
NUM_CLASSES = 10


def _round_up(x, m):
    return ((x + m - 1) // m) * m


def _images_per_block(n, cap=4):
    """Largest divisor of n that is <= cap (images processed per grid step)."""
    for d in range(min(n, cap), 0, -1):
        if n % d == 0:
            return d
    return 1


def _pick_group(w, cout, nmax=256):
    """Largest column-group width p (multiple of 4, divides w) with
    p*cout <= nmax, so the matmul N approaches the MXU width."""
    best = 0
    for p in range(4, w + 1, 4):
        if w % p == 0 and p * cout <= nmax:
            best = p
    assert best > 0, f"image width {w} must be divisible by 4"
    return best


def _grouped_conv_weight(w_hwio, p):
    """(3,3,Cin,Cout) HWIO -> (3*(p+2)*Cin, p*Cout) bf16 matrix computing p
    output columns per matmul row.  Output columns ordered [even | odd] so the
    2x1 W-pool is a half-lane max that lands in natural column order."""
    w = np.asarray(w_hwio, np.float32)
    _, _, ci, co = w.shape
    mat = np.zeros((3, p + 2, ci, p, co), np.float32)
    for ky in range(3):
        for kx in range(3):
            for j in range(p):
                mat[ky, j + kx, :, j, :] = w[ky, kx]
    order = list(range(0, p, 2)) + list(range(1, p, 2))
    mat = mat[:, :, :, order, :]
    return jnp.asarray(mat.reshape(3 * (p + 2) * ci, p * co), dtype=jnp.bfloat16)


# ---------------------------------------------------------------------------
# Fused 3x3 "SAME" conv + bias + ReLU + 2x2/2 max-pool, one matmul per step.
# Input layout : (N, L_in, p*Cin)  rows = (h, col-group) + zero vertical halo.
# Output layout: (N, L_out, (p/2)*Cout) — the NEXT consumer's layout (with its
#                own zero halo when off_out > 0).
# ---------------------------------------------------------------------------
def _make_conv_kernel(p, cin, cout, g, h, off_in, m_in, off_out, m_out, l_out):
    half = (p // 2) * cout

    def kernel(x_ref, w_ref, b_ref, o_ref):
        b = x_ref.shape[0]
        bm = b * m_in
        zero = jnp.zeros((bm, cin), x_ref.dtype)
        if g > 1:
            # Hoisted horizontal-boundary masks (columns -1 / p of each group).
            wg = lax.broadcasted_iota(jnp.int32, (bm, cin), 0) % g
            mask_l = wg != 0
            mask_r = wg != g - 1

        pieces = []
        for ky in range(3):                      # 9 slices -> ONE MXU matmul
            base = off_in + (ky - 1) * g
            cen = x_ref[:, base:base + m_in, :].reshape(bm, p * cin)
            if g > 1:
                left = x_ref[:, base - 1:base - 1 + m_in, (p - 1) * cin:]
                right = x_ref[:, base + 1:base + 1 + m_in, :cin]
                left = jnp.where(mask_l, left.reshape(bm, cin), zero)
                right = jnp.where(mask_r, right.reshape(bm, cin), zero)
            else:                                # one group spans the full row
                left = zero
                right = zero
            pieces += [left, cen, right]
        patch = jnp.concatenate(pieces, axis=-1)  # (bm, 3*(p+2)*cin) bf16

        acc = jnp.dot(patch, w_ref[...], preferred_element_type=jnp.float32)
        y = jnp.maximum(acc + b_ref[...], 0.0)           # bias + ReLU (f32)
        y = jnp.maximum(y[:, :half], y[:, half:])        # pool over W (even|odd)
        y = y.reshape(b * (h // 2), 2 * g, half)         # pair adjacent rows
        y = jnp.maximum(y[:, :g, :], y[:, g:, :])        # pool over H
        y = y.reshape(b, m_out, half).astype(o_ref.dtype)

        if off_out > 0:                                  # zero the output halo
            o_ref[:, :off_out, :] = jnp.zeros((b, off_out, half), o_ref.dtype)
        tail = l_out - off_out - m_out
        if tail > 0:
            o_ref[:, off_out + m_out:, :] = jnp.zeros((b, tail, half), o_ref.dtype)
        o_ref[:, off_out:off_out + m_out, :] = y

    return kernel


def conv_relu_pool(x, w_mat, bias, *, p, cin, cout, h, g, off_out, l_out):
    n, l_in, lane_in = x.shape
    assert lane_in == p * cin
    m_in = h * g
    off_in = (l_in - m_in) // 2
    m_out = (h // 2) * g
    half = (p // 2) * cout
    k, nn = w_mat.shape
    b = _images_per_block(n)

    kernel = _make_conv_kernel(p, cin, cout, g, h, off_in, m_in,
                               off_out, m_out, l_out)
    return pl.pallas_call(
        kernel,
        out_shape=jax.ShapeDtypeStruct((n, l_out, half), jnp.bfloat16),
        grid=(n // b,),
        in_specs=[
            pl.BlockSpec((b, l_in, lane_in), lambda i: (i, 0, 0)),
            pl.BlockSpec((k, nn), lambda i: (0, 0)),
            pl.BlockSpec((1, nn), lambda i: (0, 0)),
        ],
        out_specs=pl.BlockSpec((b, l_out, half), lambda i: (i, 0, 0)),
        compiler_params=pltpu.CompilerParams(
            dimension_semantics=("parallel",)),
    )(x, w_mat, bias)


# ---------------------------------------------------------------------------
# Classifier head: relu(x @ W1 + b1) @ W2 + b2, tiled over the batch.
# fc2 is padded to 128 output lanes (unmasked stores); wrapper slices it back.
# ---------------------------------------------------------------------------
def mlp_kernel(x_ref, w1_ref, b1_ref, w2_ref, b2_ref, o_ref):
    h = jnp.dot(x_ref[...], w1_ref[...], preferred_element_type=jnp.float32)
    h = jnp.maximum(h + b1_ref[...], 0.0)
    o = jnp.dot(h.astype(jnp.bfloat16), w2_ref[...],
                preferred_element_type=jnp.float32)
    o_ref[...] = (o + b2_ref[...]).astype(o_ref.dtype)


def mlp_head(x, w1, b1, w2, b2, num_classes):
    n, f = x.shape
    hd = w1.shape[1]
    cp = w2.shape[1]                       # num_classes padded to 128
    tn = min(64, n)                        # v5e-safe VMEM at IMAGE_SIZE=100
    out = pl.pallas_call(
        mlp_kernel,
        out_shape=jax.ShapeDtypeStruct((n, cp), jnp.float32),
        grid=(pl.cdiv(n, tn),),
        in_specs=[
            pl.BlockSpec((tn, f), lambda i: (i, 0)),
            pl.BlockSpec((f, hd), lambda i: (0, 0)),
            pl.BlockSpec((1, hd), lambda i: (0, 0)),
            pl.BlockSpec((hd, cp), lambda i: (0, 0)),
            pl.BlockSpec((1, cp), lambda i: (0, 0)),
        ],
        out_specs=pl.BlockSpec((tn, cp), lambda i: (i, 0)),
        compiler_params=pltpu.CompilerParams(
            dimension_semantics=("parallel",)),
    )(x, w1, b1, w2, b2)
    return out[:, :num_classes]


# ---------------------------------------------------------------------------
# One-time parameter preparation (wrapper-side, outside the kernels).
# ---------------------------------------------------------------------------
def prepare_params(params, image_size):
    s = image_size
    p1 = _pick_group(s, 16)      # conv1 column-group width (N1 = p1*16 <= 256)
    p2 = p1 // 2                 # conv2 group width == conv1's pooled group
    s4 = s // 4
    c2 = params["w_conv2"].shape[-1]
    # Fold torch's NCHW flatten order into fc1's rows so the conv2 output
    # (NHWC flatten order) feeds fc1 directly.
    w_fc1 = params["w_fc1"].reshape(c2, s4, s4, -1)
    w_fc1 = jnp.transpose(w_fc1, (1, 2, 0, 3)).reshape(s4 * s4 * c2, -1)
    nc = params["w_fc2"].shape[-1]
    cp = _round_up(nc, 128)
    # Pad conv1's Cin 3 -> 4 so every bf16 lane slice offset is even.
    w1 = jnp.pad(params["w_conv1"], ((0, 0), (0, 0), (0, 1), (0, 0)))
    return {
        "p1": p1, "p2": p2,
        "w_conv1": _grouped_conv_weight(w1, p1),
        "b_conv1": jnp.tile(params["b_conv1"], p1).reshape(1, -1).astype(jnp.float32),
        "w_conv2": _grouped_conv_weight(params["w_conv2"], p2),
        "b_conv2": jnp.tile(params["b_conv2"], p2).reshape(1, -1).astype(jnp.float32),
        "w_fc1": w_fc1.astype(jnp.bfloat16),
        "b_fc1": params["b_fc1"].reshape(1, -1).astype(jnp.float32),
        "w_fc2": jnp.pad(params["w_fc2"], ((0, 0), (0, cp - nc))).astype(jnp.bfloat16),
        "b_fc2": jnp.pad(params["b_fc2"], ((0, cp - nc),)).reshape(1, -1).astype(jnp.float32),
    }


# ---------------------------------------------------------------------------
# Full forward (equivalent to CNN.forward).  x_nchw: (N, 3, S, S) float32.
# ---------------------------------------------------------------------------
def cnn_forward(x_nchw, params, num_classes, image_size):
    s = image_size
    p1, p2 = params["p1"], params["p2"]
    g = s // p1                                 # groups per row (both convs)
    off = _round_up(g + 1, 8)                   # vertical-halo rows (aligned)
    m2 = (s // 2) * g                           # conv1-out / conv2-in rows
    l2 = 2 * off + m2
    m3 = (s // 4) * g                           # conv2-out rows (no halo)

    x = jnp.transpose(x_nchw, (0, 2, 3, 1))                     # NCHW -> NHWC
    x = jnp.pad(x, ((0, 0), (0, 0), (0, 0), (0, 1)))            # Cin 3 -> 4
    x = x.reshape(x.shape[0], s * g, p1 * 4).astype(jnp.bfloat16)
    x = jnp.pad(x, ((0, 0), (off, off), (0, 0)))                # zero v-halo
    x = conv_relu_pool(x, params["w_conv1"], params["b_conv1"],
                       p=p1, cin=4, cout=16, h=s, g=g, off_out=off, l_out=l2)
    x = conv_relu_pool(x, params["w_conv2"], params["b_conv2"],
                       p=p2, cin=16, cout=32, h=s // 2, g=g, off_out=0, l_out=m3)
    x = x.reshape(x.shape[0], -1)               # NHWC flatten (free, bf16)
    return mlp_head(x, params["w_fc1"], params["b_fc1"],
                    params["w_fc2"], params["b_fc2"], num_classes)


def init_params(key, num_classes, image_size):
    feat = 32 * (image_size // 4) * (image_size // 4)
    ks = jax.random.split(key, 8)
    return {
        # conv weights stored HWIO (kh, kw, cin, cout); synthetic init.
        "w_conv1": 0.10 * jax.random.normal(ks[0], (3, 3, 3, 16), jnp.float32),
        "b_conv1": 0.10 * jax.random.normal(ks[1], (16,), jnp.float32),
        "w_conv2": 0.10 * jax.random.normal(ks[2], (3, 3, 16, 32), jnp.float32),
        "b_conv2": 0.10 * jax.random.normal(ks[3], (32,), jnp.float32),
        # fc weights stored (in, out), rows in torch's NCHW-flatten order.
        "w_fc1": 0.05 * jax.random.normal(ks[4], (feat, 128), jnp.float32),
        "b_fc1": 0.05 * jax.random.normal(ks[5], (128,), jnp.float32),
        "w_fc2": 0.05 * jax.random.normal(ks[6], (128, num_classes), jnp.float32),
        "b_fc2": 0.05 * jax.random.normal(ks[7], (num_classes,), jnp.float32),
    }


# Pure-JAX reference (same math via XLA) used only to sanity-check the kernels.
def reference_forward(x_nchw, p):
    dn = ("NCHW", "HWIO", "NCHW")
    y = lax.conv_general_dilated(x_nchw, p["w_conv1"], (1, 1), "SAME",
                                 dimension_numbers=dn,
                                 precision=lax.Precision.HIGHEST)
    y = jax.nn.relu(y + p["b_conv1"].reshape(1, -1, 1, 1))
    y = lax.reduce_window(y, -jnp.inf, lax.max, (1, 1, 2, 2), (1, 1, 2, 2), "VALID")
    y = lax.conv_general_dilated(y, p["w_conv2"], (1, 1), "SAME",
                                 dimension_numbers=dn,
                                 precision=lax.Precision.HIGHEST)
    y = jax.nn.relu(y + p["b_conv2"].reshape(1, -1, 1, 1))
    y = lax.reduce_window(y, -jnp.inf, lax.max, (1, 1, 2, 2), (1, 1, 2, 2), "VALID")
    y = y.reshape(y.shape[0], -1)                            # NCHW flatten
    y = jax.nn.relu(jnp.dot(y, p["w_fc1"], precision=lax.Precision.HIGHEST)
                    + p["b_fc1"])
    return jnp.dot(y, p["w_fc2"], precision=lax.Precision.HIGHEST) + p["b_fc2"]


if __name__ == "__main__":
    key = jax.random.PRNGKey(0)
    kx, kp = jax.random.split(key)
    batch = 2
    x = jax.random.normal(kx, (batch, 3, IMAGE_SIZE, IMAGE_SIZE), jnp.float32)
    params = init_params(kp, NUM_CLASSES, IMAGE_SIZE)
    prepared = prepare_params(params, IMAGE_SIZE)

    fwd = jax.jit(lambda xin: cnn_forward(xin, prepared, NUM_CLASSES, IMAGE_SIZE))
    out = jax.block_until_ready(fwd(x))

    assert out.shape == (batch, NUM_CLASSES), out.shape
    ref = jax.block_until_ready(reference_forward(x, params))
    if not np.allclose(np.asarray(out), np.asarray(ref), rtol=2e-2, atol=2e-2):
        raise AssertionError("Pallas CNN output does not match JAX reference")
    print("KERNEL_OK")
</pallas_src>

<mosaic_0001>
module attributes {stable_mosaic.version = 11 : i64} {
  func.func @kernel(%arg0: i32, %arg1: memref<2x32x64xbf16, #tpu.memory_space<vmem>>, %arg2: memref<216x256xbf16, #tpu.memory_space<vmem>>, %arg3: memref<1x256xf32, #tpu.memory_space<vmem>>, %arg4: memref<2x24x128xbf16, #tpu.memory_space<vmem>>) attributes {dimension_semantics = [#tpu.dimension_semantics<parallel>], iteration_bounds = array<i64: 1>, scalar_prefetch = 0 : i64, scratch_operands = 0 : i64, tpu.core_type = #tpu.core_type<tc>, window_params = [{transform_indices = @transform_0, window_bounds = array<i64: 2, 32, 64>}, {pipeline_mode = #tpu.pipeline_mode<synchronous>, transform_indices = @transform_1, window_bounds = array<i64: 216, 256>}, {pipeline_mode = #tpu.pipeline_mode<synchronous>, transform_indices = @transform_2, window_bounds = array<i64: 1, 256>}, {transform_indices = @transform_3, window_bounds = array<i64: 2, 24, 128>}]} {
    %cst = arith.constant 0.000000e+00 : bf16
    %0 = vector.broadcast %cst : bf16 to vector<32x4xbf16>
    %c0 = arith.constant 0 : index
    %c7 = arith.constant 7 : index
    %c0_0 = arith.constant 0 : index
    %1 = vector.load %arg1[%c0, %c7, %c0_0] : memref<2x32x64xbf16, #tpu.memory_space<vmem>>, vector<2x16x64xbf16>
    %2 = vector.shape_cast %1 : vector<2x16x64xbf16> to vector<32x64xbf16>
    %c0_1 = arith.constant 0 : index
    %c8 = arith.constant 8 : index
    %c0_2 = arith.constant 0 : index
    %3 = vector.load %arg1[%c0_1, %c8, %c0_2] : memref<2x32x64xbf16, #tpu.memory_space<vmem>>, vector<2x16x64xbf16>
    %4 = vector.shape_cast %3 : vector<2x16x64xbf16> to vector<32x64xbf16>
    %c0_3 = arith.constant 0 : index
    %c9 = arith.constant 9 : index
    %c0_4 = arith.constant 0 : index
    %5 = vector.load %arg1[%c0_3, %c9, %c0_4] : memref<2x32x64xbf16, #tpu.memory_space<vmem>>, vector<2x16x64xbf16>
    %6 = vector.shape_cast %5 : vector<2x16x64xbf16> to vector<32x64xbf16>
    %7 = tpu.concatenate %0, %2, %0, %0, %4, %0, %0, %6, %0 in 1 : vector<32x4xbf16>, vector<32x64xbf16>, vector<32x4xbf16>, vector<32x4xbf16>, vector<32x64xbf16>, vector<32x4xbf16>, vector<32x4xbf16>, vector<32x64xbf16>, vector<32x4xbf16> -> vector<32x216xbf16>
    %c0_5 = arith.constant 0 : index
    %c0_6 = arith.constant 0 : index
    %8 = vector.load %arg2[%c0_5, %c0_6] : memref<216x256xbf16, #tpu.memory_space<vmem>>, vector<216x256xbf16>
    %cst_7 = arith.constant dense<0.000000e+00> : vector<32x256xf32>
    %9 = tpu.matmul %7, %8, %cst_7 {dimension_numbers = #tpu.dot_dimension_numbers<[1], [0], [0], [1], [0, 0, 1, 1], [], []>} : vector<32x216xbf16>, vector<216x256xbf16>, vector<32x256xf32> -> vector<32x256xf32>
    %c0_8 = arith.constant 0 : index
    %c0_9 = arith.constant 0 : index
    %10 = vector.load %arg3[%c0_8, %c0_9] : memref<1x256xf32, #tpu.memory_space<vmem>>, vector<1x256xf32>
    %11 = vector.broadcast %10 : vector<1x256xf32> to vector<32x256xf32>
    %12 = arith.addf %9, %11 : vector<32x256xf32>
    %cst_10 = arith.constant 0.000000e+00 : f32
    %13 = vector.broadcast %cst_10 : f32 to vector<32x256xf32>
    %14 = arith.maximumf %12, %13 : vector<32x256xf32>
    %15 = vector.extract_strided_slice %14 {offsets = [0, 0], sizes = [32, 128], strides = [1, 1]} : vector<32x256xf32> to vector<32x128xf32>
    %16 = vector.extract_strided_slice %14 {offsets = [0, 128], sizes = [32, 128], strides = [1, 1]} : vector<32x256xf32> to vector<32x128xf32>
    %17 = arith.maximumf %15, %16 : vector<32x128xf32>
    %18 = vector.shape_cast %17 : vector<32x128xf32> to vector<16x2x128xf32>
    %19 = vector.extract_strided_slice %18 {offsets = [0, 0, 0], sizes = [16, 1, 128], strides = [1, 1, 1]} : vector<16x2x128xf32> to vector<16x1x128xf32>
    %20 = vector.extract_strided_slice %18 {offsets = [0, 1, 0], sizes = [16, 1, 128], strides = [1, 1, 1]} : vector<16x2x128xf32> to vector<16x1x128xf32>
    %21 = arith.maximumf %19, %20 : vector<16x1x128xf32>
    %22 = vector.shape_cast %21 : vector<16x1x128xf32> to vector<2x8x128xf32>
    %23 = arith.truncf %22 : vector<2x8x128xf32> to vector<2x8x128xbf16>
    %cst_11 = arith.constant 0.000000e+00 : bf16
    %24 = vector.broadcast %cst_11 : bf16 to vector<2x8x128xbf16>
    %c0_12 = arith.constant 0 : index
    %c0_13 = arith.constant 0 : index
    %c0_14 = arith.constant 0 : index
    %25 = vector.load %arg4[%c0_12, %c0_13, %c0_14] : memref<2x24x128xbf16, #tpu.memory_space<vmem>>, vector<2x8x128xbf16>
    tpu.vector_store %arg4[%c0_12, %c0_13, %c0_14], %24 {strides = array<i32>} : memref<2x24x128xbf16, #tpu.memory_space<vmem>>, vector<2x8x128xbf16>,
    %cst_15 = arith.constant 0.000000e+00 : bf16
    %26 = vector.broadcast %cst_15 : bf16 to vector<2x8x128xbf16>
    %c0_16 = arith.constant 0 : index
    %c16 = arith.constant 16 : index
    %c0_17 = arith.constant 0 : index
    %27 = vector.load %arg4[%c0_16, %c16, %c0_17] : memref<2x24x128xbf16, #tpu.memory_space<vmem>>, vector<2x8x128xbf16>
    tpu.vector_store %arg4[%c0_16, %c16, %c0_17], %26 {strides = array<i32>} : memref<2x24x128xbf16, #tpu.memory_space<vmem>>, vector<2x8x128xbf16>,
    %c0_18 = arith.constant 0 : index
    %c8_19 = arith.constant 8 : index
    %c0_20 = arith.constant 0 : index
    %28 = vector.load %arg4[%c0_18, %c8_19, %c0_20] : memref<2x24x128xbf16, #tpu.memory_space<vmem>>, vector<2x8x128xbf16>
    tpu.vector_store %arg4[%c0_18, %c8_19, %c0_20], %23 {strides = array<i32>} : memref<2x24x128xbf16, #tpu.memory_space<vmem>>, vector<2x8x128xbf16>,
    return
  }
  func.func @transform_0(%arg0: i32) -> (i32, i32, i32) {
    %c0_i32 = arith.constant 0 : i32
    %c0_i32_0 = arith.constant 0 : i32
    %c0_i32_1 = arith.constant 0 : i32
    return %arg0, %c0_i32, %c0_i32_0 : i32, i32, i32
  }
  func.func @transform_1(%arg0: i32) -> (i32, i32) {
    %c0_i32 = arith.constant 0 : i32
    %c0_i32_0 = arith.constant 0 : i32
    %c0_i32_1 = arith.constant 0 : i32
    return %c0_i32, %c0_i32_0 : i32, i32
  }
  func.func @transform_2(%arg0: i32) -> (i32, i32) {
    %c0_i32 = arith.constant 0 : i32
    %c0_i32_0 = arith.constant 0 : i32
    %c0_i32_1 = arith.constant 0 : i32
    return %c0_i32, %c0_i32_0 : i32, i32
  }
  func.func @transform_3(%arg0: i32) -> (i32, i32, i32) {
    %c0_i32 = arith.constant 0 : i32
    %c0_i32_0 = arith.constant 0 : i32
    %c0_i32_1 = arith.constant 0 : i32
    return %arg0, %c0_i32, %c0_i32_0 : i32, i32, i32
  }
}

module attributes {stable_mosaic.version = 11 : i64} {
  func.func @kernel(%arg0: i32, %arg1: memref<2x24x128xbf16, #tpu.memory_space<vmem>>, %arg2: memref<480x256xbf16, #tpu.memory_space<vmem>>, %arg3: memref<1x256xf32, #tpu.memory_space<vmem>>, %arg4: memref<2x4x128xbf16, #tpu.memory_space<vmem>>) attributes {dimension_semantics = [#tpu.dimension_semantics<parallel>], iteration_bounds = array<i64: 1>, scalar_prefetch = 0 : i64, scratch_operands = 0 : i64, tpu.core_type = #tpu.core_type<tc>, window_params = [{transform_indices = @transform_0, window_bounds = array<i64: 2, 24, 128>}, {pipeline_mode = #tpu.pipeline_mode<synchronous>, transform_indices = @transform_1, window_bounds = array<i64: 480, 256>}, {pipeline_mode = #tpu.pipeline_mode<synchronous>, transform_indices = @transform_2, window_bounds = array<i64: 1, 256>}, {transform_indices = @transform_3, window_bounds = array<i64: 2, 4, 128>}]} {
    %cst = arith.constant 0.000000e+00 : bf16
    %0 = vector.broadcast %cst : bf16 to vector<16x16xbf16>
    %c0 = arith.constant 0 : index
    %c7 = arith.constant 7 : index
    %c0_0 = arith.constant 0 : index
    %1 = vector.load %arg1[%c0, %c7, %c0_0] : memref<2x24x128xbf16, #tpu.memory_space<vmem>>, vector<2x8x128xbf16>
    %2 = vector.shape_cast %1 : vector<2x8x128xbf16> to vector<16x128xbf16>
    %c0_1 = arith.constant 0 : index
    %c8 = arith.constant 8 : index
    %c0_2 = arith.constant 0 : index
    %3 = vector.load %arg1[%c0_1, %c8, %c0_2] : memref<2x24x128xbf16, #tpu.memory_space<vmem>>, vector<2x8x128xbf16>
    %4 = vector.shape_cast %3 : vector<2x8x128xbf16> to vector<16x128xbf16>
    %c0_3 = arith.constant 0 : index
    %c9 = arith.constant 9 : index
    %c0_4 = arith.constant 0 : index
    %5 = vector.load %arg1[%c0_3, %c9, %c0_4] : memref<2x24x128xbf16, #tpu.memory_space<vmem>>, vector<2x8x128xbf16>
    %6 = vector.shape_cast %5 : vector<2x8x128xbf16> to vector<16x128xbf16>
    %7 = tpu.concatenate %0, %2, %0, %0, %4, %0, %0, %6, %0 in 1 : vector<16x16xbf16>, vector<16x128xbf16>, vector<16x16xbf16>, vector<16x16xbf16>, vector<16x128xbf16>, vector<16x16xbf16>, vector<16x16xbf16>, vector<16x128xbf16>, vector<16x16xbf16> -> vector<16x480xbf16>
    %c0_5 = arith.constant 0 : index
    %c0_6 = arith.constant 0 : index
    %8 = vector.load %arg2[%c0_5, %c0_6] : memref<480x256xbf16, #tpu.memory_space<vmem>>, vector<480x256xbf16>
    %cst_7 = arith.constant dense<0.000000e+00> : vector<16x256xf32>
    %9 = tpu.matmul %7, %8, %cst_7 {dimension_numbers = #tpu.dot_dimension_numbers<[1], [0], [0], [1], [0, 0, 1, 1], [], []>} : vector<16x480xbf16>, vector<480x256xbf16>, vector<16x256xf32> -> vector<16x256xf32>
    %c0_8 = arith.constant 0 : index
    %c0_9 = arith.constant 0 : index
    %10 = vector.load %arg3[%c0_8, %c0_9] : memref<1x256xf32, #tpu.memory_space<vmem>>, vector<1x256xf32>
    %11 = vector.broadcast %10 : vector<1x256xf32> to vector<16x256xf32>
    %12 = arith.addf %9, %11 : vector<16x256xf32>
    %cst_10 = arith.constant 0.000000e+00 : f32
    %13 = vector.broadcast %cst_10 : f32 to vector<16x256xf32>
    %14 = arith.maximumf %12, %13 : vector<16x256xf32>
    %15 = vector.extract_strided_slice %14 {offsets = [0, 0], sizes = [16, 128], strides = [1, 1]} : vector<16x256xf32> to vector<16x128xf32>
    %16 = vector.extract_strided_slice %14 {offsets = [0, 128], sizes = [16, 128], strides = [1, 1]} : vector<16x256xf32> to vector<16x128xf32>
    %17 = arith.maximumf %15, %16 : vector<16x128xf32>
    %18 = vector.shape_cast %17 : vector<16x128xf32> to vector<8x2x128xf32>
    %19 = vector.extract_strided_slice %18 {offsets = [0, 0, 0], sizes = [8, 1, 128], strides = [1, 1, 1]} : vector<8x2x128xf32> to vector<8x1x128xf32>
    %20 = vector.extract_strided_slice %18 {offsets = [0, 1, 0], sizes = [8, 1, 128], strides = [1, 1, 1]} : vector<8x2x128xf32> to vector<8x1x128xf32>
    %21 = arith.maximumf %19, %20 : vector<8x1x128xf32>
    %22 = vector.shape_cast %21 : vector<8x1x128xf32> to vector<2x4x128xf32>
    %23 = arith.truncf %22 : vector<2x4x128xf32> to vector<2x4x128xbf16>
    %c0_11 = arith.constant 0 : index
    %c0_12 = arith.constant 0 : index
    %c0_13 = arith.constant 0 : index
    %24 = vector.load %arg4[%c0_11, %c0_12, %c0_13] : memref<2x4x128xbf16, #tpu.memory_space<vmem>>, vector<2x4x128xbf16>
    tpu.vector_store %arg4[%c0_11, %c0_12, %c0_13], %23 {strides = array<i32>} : memref<2x4x128xbf16, #tpu.memory_space<vmem>>, vector<2x4x128xbf16>,
    return
  }
  func.func @transform_0(%arg0: i32) -> (i32, i32, i32) {
    %c0_i32 = arith.constant 0 : i32
    %c0_i32_0 = arith.constant 0 : i32
    %c0_i32_1 = arith.constant 0 : i32
    return %arg0, %c0_i32, %c0_i32_0 : i32, i32, i32
  }
  func.func @transform_1(%arg0: i32) -> (i32, i32) {
    %c0_i32 = arith.constant 0 : i32
    %c0_i32_0 = arith.constant 0 : i32
    %c0_i32_1 = arith.constant 0 : i32
    return %c0_i32, %c0_i32_0 : i32, i32
  }
  func.func @transform_2(%arg0: i32) -> (i32, i32) {
    %c0_i32 = arith.constant 0 : i32
    %c0_i32_0 = arith.constant 0 : i32
    %c0_i32_1 = arith.constant 0 : i32
    return %c0_i32, %c0_i32_0 : i32, i32
  }
  func.func @transform_3(%arg0: i32) -> (i32, i32, i32) {
    %c0_i32 = arith.constant 0 : i32
    %c0_i32_0 = arith.constant 0 : i32
    %c0_i32_1 = arith.constant 0 : i32
    return %arg0, %c0_i32, %c0_i32_0 : i32, i32, i32
  }
}

module attributes {stable_mosaic.version = 11 : i64} {
  func.func @mlp_kernel(%arg0: i32, %arg1: memref<2x512xbf16, #tpu.memory_space<vmem>>, %arg2: memref<512x128xbf16, #tpu.memory_space<vmem>>, %arg3: memref<1x128xf32, #tpu.memory_space<vmem>>, %arg4: memref<128x128xbf16, #tpu.memory_space<vmem>>, %arg5: memref<1x128xf32, #tpu.memory_space<vmem>>, %arg6: memref<2x128xf32, #tpu.memory_space<vmem>>) attributes {dimension_semantics = [#tpu.dimension_semantics<parallel>], iteration_bounds = array<i64: 1>, scalar_prefetch = 0 : i64, scratch_operands = 0 : i64, tpu.core_type = #tpu.core_type<tc>, window_params = [{transform_indices = @transform_0, window_bounds = array<i64: 2, 512>}, {pipeline_mode = #tpu.pipeline_mode<synchronous>, transform_indices = @transform_1, window_bounds = array<i64: 512, 128>}, {pipeline_mode = #tpu.pipeline_mode<synchronous>, transform_indices = @transform_2, window_bounds = array<i64: 1, 128>}, {pipeline_mode = #tpu.pipeline_mode<synchronous>, transform_indices = @transform_3, window_bounds = array<i64: 128, 128>}, {pipeline_mode = #tpu.pipeline_mode<synchronous>, transform_indices = @transform_4, window_bounds = array<i64: 1, 128>}, {transform_indices = @transform_5, window_bounds = array<i64: 2, 128>}]} {
    %c0 = arith.constant 0 : index
    %c0_0 = arith.constant 0 : index
    %0 = vector.load %arg1[%c0, %c0_0] : memref<2x512xbf16, #tpu.memory_space<vmem>>, vector<2x512xbf16>
    %c0_1 = arith.constant 0 : index
    %c0_2 = arith.constant 0 : index
    %1 = vector.load %arg2[%c0_1, %c0_2] : memref<512x128xbf16, #tpu.memory_space<vmem>>, vector<512x128xbf16>
    %cst = arith.constant dense<0.000000e+00> : vector<2x128xf32>
    %2 = tpu.matmul %0, %1, %cst {dimension_numbers = #tpu.dot_dimension_numbers<[1], [0], [0], [1], [0, 0, 1, 1], [], []>} : vector<2x512xbf16>, vector<512x128xbf16>, vector<2x128xf32> -> vector<2x128xf32>
    %c0_3 = arith.constant 0 : index
    %c0_4 = arith.constant 0 : index
    %3 = vector.load %arg3[%c0_3, %c0_4] : memref<1x128xf32, #tpu.memory_space<vmem>>, vector<1x128xf32>
    %4 = vector.broadcast %3 : vector<1x128xf32> to vector<2x128xf32>
    %5 = arith.addf %2, %4 : vector<2x128xf32>
    %cst_5 = arith.constant 0.000000e+00 : f32
    %6 = vector.broadcast %cst_5 : f32 to vector<2x128xf32>
    %7 = arith.maximumf %5, %6 : vector<2x128xf32>
    %8 = arith.truncf %7 : vector<2x128xf32> to vector<2x128xbf16>
    %c0_6 = arith.constant 0 : index
    %c0_7 = arith.constant 0 : index
    %9 = vector.load %arg4[%c0_6, %c0_7] : memref<128x128xbf16, #tpu.memory_space<vmem>>, vector<128x128xbf16>
    %cst_8 = arith.constant dense<0.000000e+00> : vector<2x128xf32>
    %10 = tpu.matmul %8, %9, %cst_8 {dimension_numbers = #tpu.dot_dimension_numbers<[1], [0], [0], [1], [0, 0, 1, 1], [], []>} : vector<2x128xbf16>, vector<128x128xbf16>, vector<2x128xf32> -> vector<2x128xf32>
    %c0_9 = arith.constant 0 : index
    %c0_10 = arith.constant 0 : index
    %11 = vector.load %arg5[%c0_9, %c0_10] : memref<1x128xf32, #tpu.memory_space<vmem>>, vector<1x128xf32>
    %12 = vector.broadcast %11 : vector<1x128xf32> to vector<2x128xf32>
    %13 = arith.addf %10, %12 : vector<2x128xf32>
    %c0_11 = arith.constant 0 : index
    %c0_12 = arith.constant 0 : index
    %14 = vector.load %arg6[%c0_11, %c0_12] : memref<2x128xf32, #tpu.memory_space<vmem>>, vector<2x128xf32>
    tpu.vector_store %arg6[%c0_11, %c0_12], %13 {strides = array<i32>} : memref<2x128xf32, #tpu.memory_space<vmem>>, vector<2x128xf32>,
    return
  }
  func.func @transform_0(%arg0: i32) -> (i32, i32) {
    %c0_i32 = arith.constant 0 : i32
    %c0_i32_0 = arith.constant 0 : i32
    return %arg0, %c0_i32 : i32, i32
  }
  func.func @transform_1(%arg0: i32) -> (i32, i32) {
    %c0_i32 = arith.constant 0 : i32
    %c0_i32_0 = arith.constant 0 : i32
    %c0_i32_1 = arith.constant 0 : i32
    return %c0_i32, %c0_i32_0 : i32, i32
  }
  func.func @transform_2(%arg0: i32) -> (i32, i32) {
    %c0_i32 = arith.constant 0 : i32
    %c0_i32_0 = arith.constant 0 : i32
    %c0_i32_1 = arith.constant 0 : i32
    return %c0_i32, %c0_i32_0 : i32, i32
  }
  func.func @transform_3(%arg0: i32) -> (i32, i32) {
    %c0_i32 = arith.constant 0 : i32
    %c0_i32_0 = arith.constant 0 : i32
    %c0_i32_1 = arith.constant 0 : i32
    return %c0_i32, %c0_i32_0 : i32, i32
  }
  func.func @transform_4(%arg0: i32) -> (i32, i32) {
    %c0_i32 = arith.constant 0 : i32
    %c0_i32_0 = arith.constant 0 : i32
    %c0_i32_1 = arith.constant 0 : i32
    return %c0_i32, %c0_i32_0 : i32, i32
  }
  func.func @transform_5(%arg0: i32) -> (i32, i32) {
    %c0_i32 = arith.constant 0 : i32
    %c0_i32_0 = arith.constant 0 : i32
    return %arg0, %c0_i32 : i32, i32
  }
}

</mosaic_0001>

<llo_original>
// kernel: _lambda_.5
$region0: #{_lambda_.5}
  #allocation0 [shape = 'u32[]', space=smem, size = 0x4, offset = 0x4, fixed_abs, tag = 'smem constant byte address 0x4 - core index']
  #allocation1 [shape = 'u32[144,128]{1,0:T(1,128)}', space=vmem, size = 0x12000, scoped, tag = 'internal scratch']
  %s0 = inlined_call_operand.vmem [shape: bf16[2,512], index: 0, kind: input, shape index: {}]
  %s1 = inlined_call_operand.vmem [shape: bf16[512,128], index: 1, kind: input, shape index: {}]
  %s2 = inlined_call_operand.vmem [shape: f32[1,128], index: 2, kind: input, shape index: {}]
  %s3 = inlined_call_operand.vmem [shape: bf16[128,128], index: 3, kind: input, shape index: {}]
  %s4 = inlined_call_operand.vmem [shape: f32[1,128], index: 4, kind: input, shape index: {}]
  %s5 = inlined_call_operand.hbm [shape: f32[2,128], index: 5, kind: output, shape index: {}]
  %s6 = sld [smem:[#allocation0]]
  $region30: #{_lambda_.5} parent=0
    _
  %s8 = ssub.s32 1, %s6
  %s9 = scalar_select 0, %s8, %s6
  $region1: #{_lambda_.5} parent=0
    #allocation2 [shape = 'u8[1024]{0}', space=vmem, size = 0x400, scoped, tag = 'output window, operand 0, single buffered']
    #allocation3 [shape = 's32[1]{0}', space=sflag, size = 0x4, scoped, tag = 'scoped memory for _lambda_.5']
    %10 = vsyncpa [#allocation3], 0
    // Predicated region
    $region2: #{_lambda_.5} parent=1 // pred_check
      _
    $region3: #{_lambda_.5} parent=1 // pred_check_branch
      %12 = sbr.rel (0) target = $region5
    $region4: #{_lambda_.5} parent=1 // pred_region
      _
    $region5: #{_lambda_.5} parent=1 // pred_fallthru
      _
    // Predicated region
    $region6: #{_lambda_.5} parent=1 // pred_check
      _
    $region7: #{_lambda_.5} parent=1 // pred_check_branch
      %14 = sbr.rel (0) target = $region9
    $region8: #{_lambda_.5} parent=1 // pred_region
      _
    $region9: #{_lambda_.5} parent=1 // pred_fallthru
      _
    // Predicated region
    $region10: #{_lambda_.5} parent=1 // pred_check
      _
    $region11: #{_lambda_.5} parent=1 // pred_check_branch
      %16 = sbr.rel (0) target = $region13
    $region12: #{_lambda_.5} parent=1 // pred_region
      _
    $region13: #{_lambda_.5} parent=1 // pred_fallthru
      _
    // Predicated region
    $region14: #{_lambda_.5} parent=1 // pred_check
      _
    $region15: #{_lambda_.5} parent=1 // pred_check_branch
      %18 = sbr.rel (0) target = $region17
    $region16: #{_lambda_.5} parent=1 // pred_region
      _
    $region17: #{_lambda_.5} parent=1 // pred_fallthru
      _
    // Predicated region
    $region18: #{_lambda_.5} parent=1 // pred_check
      _
    $region19: #{_lambda_.5} parent=1 // pred_check_branch
      %20 = sbr.rel (0) target = $region21
    $region20: #{_lambda_.5} parent=1 // pred_region
      _
    $region21: #{_lambda_.5} parent=1 // pred_fallthru
      _
    %v22 = vld [vmem:[%s0] sm:$0xf]
    %v23 = vld [vmem:[%s1] sm:$0xf]
    %v24 = vld [vmem:[%s1 + $0x4] sm:$0xf]
    %v25 = vld [vmem:[%s1 + $0x8] sm:$0xf]
    %v26 = vld [vmem:[%s1 + $0xc] sm:$0xf]
    %v27 = vld [vmem:[%s1 + $0x10] sm:$0xf]
    %v28 = vld [vmem:[%s1 + $0x14] sm:$0xf]
    %v29 = vld [vmem:[%s1 + $0x18] sm:$0xf]
    %v30 = vld [vmem:[%s1 + $0x1c] sm:$0xf]
    %v31 = vld [vmem:[%s1 + $0x20] sm:$0xf]
    %v32 = vld [vmem:[%s1 + $0x24] sm:$0xf]
    %v33 = vld [vmem:[%s1 + $0x28] sm:$0xf]
    %v34 = vld [vmem:[%s1 + $0x2c] sm:$0xf]
    %v35 = vld [vmem:[%s1 + $0x30] sm:$0xf]
    %v36 = vld [vmem:[%s1 + $0x34] sm:$0xf]
    %v37 = vld [vmem:[%s1 + $0x38] sm:$0xf]
    %v38 = vld [vmem:[%s1 + $0x3c] sm:$0xf]
    %v39 = vld [vmem:[%s1 + $0x40] sm:$0xf]
    %v40 = vld [vmem:[%s1 + $0x44] sm:$0xf]
    %v41 = vld [vmem:[%s1 + $0x48] sm:$0xf]
    %v42 = vld [vmem:[%s1 + $0x4c] sm:$0xf]
    %v43 = vld [vmem:[%s1 + $0x50] sm:$0xf]
    %v44 = vld [vmem:[%s1 + $0x54] sm:$0xf]
    %v45 = vld [vmem:[%s1 + $0x58] sm:$0xf]
    %v46 = vld [vmem:[%s1 + $0x5c] sm:$0xf]
    %v47 = vld [vmem:[%s1 + $0x60] sm:$0xf]
    %v48 = vld [vmem:[%s1 + $0x64] sm:$0xf]
    %v49 = vld [vmem:[%s1 + $0x68] sm:$0xf]
    %v50 = vld [vmem:[%s1 + $0x6c] sm:$0xf]
    %v51 = vld [vmem:[%s1 + $0x70] sm:$0xf]
    %v52 = vld [vmem:[%s1 + $0x74] sm:$0xf]
    %v53 = vld [vmem:[%s1 + $0x78] sm:$0xf]
    %v54 = vld [vmem:[%s1 + $0x7c] sm:$0xf]
    %v55 = vld [vmem:[%s1 + $0x80] sm:$0xf]
    %v56 = vld [vmem:[%s1 + $0x84] sm:$0xf]
    %v57 = vld [vmem:[%s1 + $0x88] sm:$0xf]
    %v58 = vld [vmem:[%s1 + $0x8c] sm:$0xf]
    %v59 = vld [vmem:[%s1 + $0x90] sm:$0xf]
    %v60 = vld [vmem:[%s1 + $0x94] sm:$0xf]
    %v61 = vld [vmem:[%s1 + $0x98] sm:$0xf]
    %v62 = vld [vmem:[%s1 + $0x9c] sm:$0xf]
    %v63 = vld [vmem:[%s1 + $0xa0] sm:$0xf]
    %v64 = vld [vmem:[%s1 + $0xa4] sm:$0xf]
    %v65 = vld [vmem:[%s1 + $0xa8] sm:$0xf]
    %v66 = vld [vmem:[%s1 + $0xac] sm:$0xf]
    %v67 = vld [vmem:[%s1 + $0xb0] sm:$0xf]
    %v68 = vld [vmem:[%s1 + $0xb4] sm:$0xf]
    %v69 = vld [vmem:[%s1 + $0xb8] sm:$0xf]
    %v70 = vld [vmem:[%s1 + $0xbc] sm:$0xf]
    %v71 = vld [vmem:[%s1 + $0xc0] sm:$0xf]
    %v72 = vld [vmem:[%s1 + $0xc4] sm:$0xf]
    %v73 = vld [vmem:[%s1 + $0xc8] sm:$0xf]
    %v74 = vld [vmem:[%s1 + $0xcc] sm:$0xf]
    %v75 = vld [vmem:[%s1 + $0xd0] sm:$0xf]
    %v76 = vld [vmem:[%s1 + $0xd4] sm:$0xf]
    %v77 = vld [vmem:[%s1 + $0xd8] sm:$0xf]
    %v78 = vld [vmem:[%s1 + $0xdc] sm:$0xf]
    %v79 = vld [vmem:[%s1 + $0xe0] sm:$0xf]
    %v80 = vld [vmem:[%s1 + $0xe4] sm:$0xf]
    %v81 = vld [vmem:[%s1 + $0xe8] sm:$0xf]
    %v82 = vld [vmem:[%s1 + $0xec] sm:$0xf]
    %v83 = vld [vmem:[%s1 + $0xf0] sm:$0xf]
    %v84 = vld [vmem:[%s1 + $0xf4] sm:$0xf]
    %v85 = vld [vmem:[%s1 + $0xf8] sm:$0xf]
    %v86 = vld [vmem:[%s1 + $0xfc] sm:$0xf]
    %v87 = vld [vmem:[%s2] sm:$0x1]
    %v89 = vlaneseq
    %v90 = vshrl.u32 %v89, 7
    %v91 = vsub.s32 0, %v90
    %v92 = vrot.slane %v87, %v91
    %v96 = vunpack.c.l.s4 1966171168
    %v97 = vunpack.c.0.s8 %v96
    %v98 = vlaneseq
    %v99 = vshrl.u32 %v98, 7
    %v100 = vsub.s32 %v97, %v99
    %v101 = vrot.slane %v22, %v100
    %v102 = vcombine.high %v101, %v101
    %v104 = vunpack.c.l.s4 1966171168
    %v105 = vunpack.c.0.s8 %v104
    %v106 = vlaneseq
    %v107 = vshrl.u32 %v106, 7
    %v108 = vsub.s32 %v105, %v107
    %v109 = vrot.slane %v101, %v108
    %v111 = vunpack.c.l.s4 1966171168
    %v112 = vunpack.c.0.s8 %v111
    %v113 = vlaneseq
    %v114 = vshrl.u32 %v113, 7
    %v115 = vsub.s32 %v112, %v114
    %v116 = vrot.slane %v102, %v115
    %v117 = vcombine.high %v109, %v109
    %v118 = vcombine.high %v116, %v116
    %v187 = vunpack.c.l.b16 %v23
    %v188 = vunpack.c.l.b16 %v24
    %v189 = vunpack.c.l.b16 %v25
    %v190 = vunpack.c.l.b16 %v26
    %v191 = vunpack.c.l.b16 %v27
    %v192 = vunpack.c.l.b16 %v28
    %v193 = vunpack.c.l.b16 %v29
    %v194 = vunpack.c.l.b16 %v30
    %v195 = vunpack.c.l.b16 %v31
    %v196 = vunpack.c.l.b16 %v32
    %v197 = vunpack.c.l.b16 %v33
    %v198 = vunpack.c.l.b16 %v34
    %v199 = vunpack.c.l.b16 %v35
    %v200 = vunpack.c.l.b16 %v36
    %v201 = vunpack.c.l.b16 %v37
    %v202 = vunpack.c.l.b16 %v38
    %v203 = vunpack.c.l.b16 %v39
    %v204 = vunpack.c.l.b16 %v40
    %v205 = vunpack.c.l.b16 %v41
    %v206 = vunpack.c.l.b16 %v42
    %v207 = vunpack.c.l.b16 %v43
    %v208 = vunpack.c.l.b16 %v44
    %v209 = vunpack.c.l.b16 %v45
    %v210 = vunpack.c.l.b16 %v46
    %v211 = vunpack.c.l.b16 %v47
    %v212 = vunpack.c.l.b16 %v48
    %v213 = vunpack.c.l.b16 %v49
    %v214 = vunpack.c.l.b16 %v50
    %v215 = vunpack.c.l.b16 %v51
    %v216 = vunpack.c.l.b16 %v52
    %v217 = vunpack.c.l.b16 %v53
    %v218 = vunpack.c.l.b16 %v54
    %v219 = vunpack.c.l.b16 %v55
    %v220 = vunpack.c.l.b16 %v56
    %v221 = vunpack.c.l.b16 %v57
    %v222 = vunpack.c.l.b16 %v58
    %v223 = vunpack.c.l.b16 %v59
    %v224 = vunpack.c.l.b16 %v60
    %v225 = vunpack.c.l.b16 %v61
    %v226 = vunpack.c.l.b16 %v62
    %v227 = vunpack.c.l.b16 %v63
    %v228 = vunpack.c.l.b16 %v64
    %v229 = vunpack.c.l.b16 %v65
    %v230 = vunpack.c.l.b16 %v66
    %v231 = vunpack.c.l.b16 %v67
    %v232 = vunpack.c.l.b16 %v68
    %v233 = vunpack.c.l.b16 %v69
    %v234 = vunpack.c.l.b16 %v70
    %v235 = vunpack.c.l.b16 %v71
    %v236 = vunpack.c.l.b16 %v72
    %v237 = vunpack.c.l.b16 %v73
    %v238 = vunpack.c.l.b16 %v74
    %v239 = vunpack.c.l.b16 %v75
    %v240 = vunpack.c.l.b16 %v76
    %v241 = vunpack.c.l.b16 %v77
    %v242 = vunpack.c.l.b16 %v78
    %v243 = vunpack.c.l.b16 %v79
    %v244 = vunpack.c.l.b16 %v80
    %v245 = vunpack.c.l.b16 %v81
    %v246 = vunpack.c.l.b16 %v82
    %v247 = vunpack.c.l.b16 %v83
    %v248 = vunpack.c.l.b16 %v84
    %v249 = vunpack.c.l.b16 %v85
    %v250 = vunpack.c.l.b16 %v86
    %v251 = vpack.c.b16 %v188, %v187
    %v252 = vpack.c.b16 %v190, %v189
    %v253 = vpack.c.b16 %v192, %v191
    %v254 = vpack.c.b16 %v194, %v193
    %v255 = vpack.c.b16 %v196, %v195
    %v256 = vpack.c.b16 %v198, %v197
    %v257 = vpack.c.b16 %v200, %v199
    %v258 = vpack.c.b16 %v202, %v201
    %v259 = vpack.c.b16 %v204, %v203
    %v260 = vpack.c.b16 %v206, %v205
    %v261 = vpack.c.b16 %v208, %v207
    %v262 = vpack.c.b16 %v210, %v209
    %v263 = vpack.c.b16 %v212, %v211
    %v264 = vpack.c.b16 %v214, %v213
    %v265 = vpack.c.b16 %v216, %v215
    %v266 = vpack.c.b16 %v218, %v217
    %v267 = vpack.c.b16 %v220, %v219
    %v268 = vpack.c.b16 %v222, %v221
    %v269 = vpack.c.b16 %v224, %v223
    %v270 = vpack.c.b16 %v226, %v225
    %v271 = vpack.c.b16 %v228, %v227
    %v272 = vpack.c.b16 %v230, %v229
    %v273 = vpack.c.b16 %v232, %v231
    %v274 = vpack.c.b16 %v234, %v233
    %v275 = vpack.c.b16 %v236, %v235
    %v276 = vpack.c.b16 %v238, %v237
    %v277 = vpack.c.b16 %v240, %v239
    %v278 = vpack.c.b16 %v242, %v241
    %v279 = vpack.c.b16 %v244, %v243
    %v280 = vpack.c.b16 %v246, %v245
    %v281 = vpack.c.b16 %v248, %v247
    %v282 = vpack.c.b16 %v250, %v249
    %315 = vmatprep.subr.bf16.mxu0 0
    %316 = vmatpush1.bf16.msra.mxu0 %v258
    %317 = vmatprep.subr.bf16.mxu0 0
    %318 = vmatpush1.bf16.msra.mxu0 %v257
    %319 = vmatprep.subr.bf16.mxu0 0
    %320 = vmatpush1.bf16.msra.mxu0 %v256
    %321 = vmatprep.subr.bf16.mxu0 0
    %322 = vmatpush1.bf16.msra.mxu0 %v255
    %323 = vmatprep.subr.bf16.mxu0 0
    %324 = vmatpush1.bf16.msra.mxu0 %v254
    %325 = vmatprep.subr.bf16.mxu0 0
    %326 = vmatpush1.bf16.msra.mxu0 %v253
    %327 = vmatprep.subr.bf16.mxu0 0
    %328 = vmatpush1.bf16.msra.mxu0 %v252
    %329 = vmatprep.subr.bf16.mxu0 0
    %330 = vmatpush1.bf16.msra.mxu0 %v251
    %331 = vmatprep.subr.bf16.mxu0 0
    %332 = vmatpush2.bf16.msra.mxu0 %v266
    %333 = vmatprep.subr.bf16.mxu0 0
    %334 = vmatpush2.bf16.msra.mxu0 %v265
    %335 = vmatprep.subr.bf16.mxu0 0
    %336 = vmatpush2.bf16.msra.mxu0 %v264
    %337 = vmatprep.subr.bf16.mxu0 0
    %338 = vmatpush2.bf16.msra.mxu0 %v263
    %339 = vmatprep.subr.bf16.mxu0 0
    %340 = vmatpush2.bf16.msra.mxu0 %v262
    %341 = vmatprep.subr.bf16.mxu0 0
    %342 = vmatpush2.bf16.msra.mxu0 %v261
    %343 = vmatprep.subr.bf16.mxu0 0
    %344 = vmatpush2.bf16.msra.mxu0 %v260
    %345 = vmatprep.subr.bf16.mxu0 0
    %346 = vmatpush2.bf16.msra.mxu0 %v259
    %347 = vmatprep.mubr.bf16.mxu0 %v116
    %348 = vmatmul.mubr.bf16.gmra.mxu0 %v109
    %v349 = vpop.f32.mrf.mxu0
    %v350 = vadd.f32 %v92, %v349
    %v351 = vpop.f32.mrf.mxu0
    %v352 = vpop.f32.mrf.mxu0
    %v353 = vpop.f32.mrf.mxu0
    %354 = vdwg.mxu0
    %355 = vmatprep.subr.bf16.mxu0 0
    %356 = vmatpush1.bf16.msra.mxu0 %v274
    %357 = vmatprep.subr.bf16.mxu0 0
    %358 = vmatpush1.bf16.msra.mxu0 %v273
    %359 = vmatprep.subr.bf16.mxu0 0
    %360 = vmatpush1.bf16.msra.mxu0 %v272
    %361 = vmatprep.subr.bf16.mxu0 0
    %362 = vmatpush1.bf16.msra.mxu0 %v271
    %363 = vmatprep.subr.bf16.mxu0 0
    %364 = vmatpush1.bf16.msra.mxu0 %v270
    %365 = vmatprep.subr.bf16.mxu0 0
    %366 = vmatpush1.bf16.msra.mxu0 %v269
    %367 = vmatprep.subr.bf16.mxu0 0
    %368 = vmatpush1.bf16.msra.mxu0 %v268
    %369 = vmatprep.subr.bf16.mxu0 0
    %370 = vmatpush1.bf16.msra.mxu0 %v267
    %371 = vmatprep.subr.bf16.mxu0 0
    %372 = vmatpush2.bf16.msra.mxu0 %v282
    %373 = vmatprep.subr.bf16.mxu0 0
    %374 = vmatpush2.bf16.msra.mxu0 %v281
    %375 = vmatprep.subr.bf16.mxu0 0
    %376 = vmatpush2.bf16.msra.mxu0 %v280
    %377 = vmatprep.subr.bf16.mxu0 0
    %378 = vmatpush2.bf16.msra.mxu0 %v279
    %379 = vmatprep.subr.bf16.mxu0 0
    %380 = vmatpush2.bf16.msra.mxu0 %v278
    %381 = vmatprep.subr.bf16.mxu0 0
    %382 = vmatpush2.bf16.msra.mxu0 %v277
    %383 = vmatprep.subr.bf16.mxu0 0
    %384 = vmatpush2.bf16.msra.mxu0 %v276
    %385 = vmatprep.subr.bf16.mxu0 0
    %386 = vmatpush2.bf16.msra.mxu0 %v275
    %387 = vmatprep.mubr.bf16.mxu0 %v118
    %388 = vmatmul.mubr.bf16.gmra.mxu0 %v117
    %v389 = vpop.f32.mrf.mxu0
    %v390 = vadd.f32 %v350, %v389
    %v391 = vpop.f32.mrf.mxu0
    %v392 = vpop.f32.mrf.mxu0
    %v393 = vpop.f32.mrf.mxu0
    %394 = vdwg.mxu0
    %v395 = vmax.f32 %v390, 0.0
    %v396 = vpack.c.bf16 %v395, %v395
    %v397 = vld [vmem:[%s3] sm:$0xf]
    %v398 = vld [vmem:[%s3 + $0x4] sm:$0xf]
    %v399 = vld [vmem:[%s3 + $0x8] sm:$0xf]
    %v400 = vld [vmem:[%s3 + $0xc] sm:$0xf]
    %v401 = vld [vmem:[%s3 + $0x10] sm:$0xf]
    %v402 = vld [vmem:[%s3 + $0x14] sm:$0xf]
    %v403 = vld [vmem:[%s3 + $0x18] sm:$0xf]
    %v404 = vld [vmem:[%s3 + $0x1c] sm:$0xf]
    %v405 = vld [vmem:[%s3 + $0x20] sm:$0xf]
    %v406 = vld [vmem:[%s3 + $0x24] sm:$0xf]
    %v407 = vld [vmem:[%s3 + $0x28] sm:$0xf]
    %v408 = vld [vmem:[%s3 + $0x2c] sm:$0xf]
    %v409 = vld [vmem:[%s3 + $0x30] sm:$0xf]
    %v410 = vld [vmem:[%s3 + $0x34] sm:$0xf]
    %v411 = vld [vmem:[%s3 + $0x38] sm:$0xf]
    %v412 = vld [vmem:[%s3 + $0x3c] sm:$0xf]
    %v413 = vld [vmem:[%s4] sm:$0x1]
    %v415 = vlaneseq
    %v416 = vshrl.u32 %v415, 7
    %v417 = vsub.s32 0, %v416
    %v418 = vrot.slane %v413, %v417
    %v436 = vunpack.c.l.b16 %v397
    %v437 = vunpack.c.l.b16 %v398
    %v438 = vunpack.c.l.b16 %v399
    %v439 = vunpack.c.l.b16 %v400
    %v440 = vunpack.c.l.b16 %v401
    %v441 = vunpack.c.l.b16 %v402
    %v442 = vunpack.c.l.b16 %v403
    %v443 = vunpack.c.l.b16 %v404
    %v444 = vunpack.c.l.b16 %v405
    %v445 = vunpack.c.l.b16 %v406
    %v446 = vunpack.c.l.b16 %v407
    %v447 = vunpack.c.l.b16 %v408
    %v448 = vunpack.c.l.b16 %v409
    %v449 = vunpack.c.l.b16 %v410
    %v450 = vunpack.c.l.b16 %v411
    %v451 = vunpack.c.l.b16 %v412
    %v452 = vpack.c.b16 %v437, %v436
    %v453 = vpack.c.b16 %v439, %v438
    %v454 = vpack.c.b16 %v441, %v440
    %v455 = vpack.c.b16 %v443, %v442
    %v456 = vpack.c.b16 %v445, %v444
    %v457 = vpack.c.b16 %v447, %v446
    %v458 = vpack.c.b16 %v449, %v448
    %v459 = vpack.c.b16 %v451, %v450
    %468 = vmatprep.subr.bf16.mxu0 0
    %469 = vmatpush1.bf16.msra.mxu0 %v459
    %470 = vmatprep.subr.bf16.mxu0 0
    %471 = vmatpush1.bf16.msra.mxu0 %v458
    %472 = vmatprep.subr.bf16.mxu0 0
    %473 = vmatpush1.bf16.msra.mxu0 %v457
    %474 = vmatprep.subr.bf16.mxu0 0
    %475 = vmatpush1.bf16.msra.mxu0 %v456
    %476 = vmatprep.subr.bf16.mxu0 0
    %477 = vmatpush1.bf16.msra.mxu0 %v455
    %478 = vmatprep.subr.bf16.mxu0 0
    %479 = vmatpush1.bf16.msra.mxu0 %v454
    %480 = vmatprep.subr.bf16.mxu0 0
    %481 = vmatpush1.bf16.msra.mxu0 %v453
    %482 = vmatprep.subr.bf16.mxu0 0
    %483 = vmatpush1.bf16.msra.mxu0 %v452
    %484 = vmatprep.subr.bf16.mxu0 0
    %485 = vmatpush2.bf16.msra.mxu0 0
    %486 = vmatprep.subr.bf16.mxu0 0
    %487 = vmatpush2.bf16.msra.mxu0 0
    %488 = vmatprep.subr.bf16.mxu0 0
    %489 = vmatpush2.bf16.msra.mxu0 0
    %490 = vmatprep.subr.bf16.mxu0 0
    %491 = vmatpush2.bf16.msra.mxu0 0
    %492 = vmatprep.subr.bf16.mxu0 0
    %493 = vmatpush2.bf16.msra.mxu0 0
    %494 = vmatprep.subr.bf16.mxu0 0
    %495 = vmatpush2.bf16.msra.mxu0 0
    %496 = vmatprep.subr.bf16.mxu0 0
    %497 = vmatpush2.bf16.msra.mxu0 0
    %498 = vmatprep.subr.bf16.mxu0 0
    %499 = vmatpush2.bf16.msra.mxu0 0
    %500 = vmatprep.mubr.bf16.mxu0 0
    %501 = vmatmul.mubr.bf16.gmra.mxu0 %v396
    %v502 = vpop.f32.mrf.mxu0
    %v503 = vadd.f32 %v418, %v502
    %v504 = vpop.f32.mrf.mxu0
    %v505 = vpop.f32.mrf.mxu0
    %v506 = vpop.f32.mrf.mxu0
    %507 = vdwg.mxu0
    %508 = vst [vmem:[#allocation2] sm:$0x3] %v503
    // Predicated region
    $region22: #{_lambda_.5} parent=1 // pred_check
      _
    $region23: #{_lambda_.5} parent=1 // pred_check_branch
      %510 = sbr.rel (0) target = $region25
    $region24: #{_lambda_.5} parent=1 // pred_region
      %s512 = ssub.s32 32, 32
      %513 = vsyncadd [#allocation3], %s512
      %s515 = sshll.u32 [#allocation2], 4
      %s516 = int_to_ptr.vmem [resolvable:$true] %s515
      %518 = dma.vmem_to_hbm [thread:$0]  %s516, 32, %s5, [#allocation3]
    $region25: #{_lambda_.5} parent=1 // pred_fallthru
      _
    // Predicated region
    $region26: #{_lambda_.5} parent=1 // pred_check
      _
    $region27: #{_lambda_.5} parent=1 // pred_check_branch
      %520 = sbr.rel (0) target = $region29
    $region28: #{_lambda_.5} parent=1 // pred_region
      %521 = dma.done [#allocation3], 32
    $region29: #{_lambda_.5} parent=1 // pred_fallthru
      _
    %522 = vsyncpa [#allocation3], 1

// kernel: _lambda_.3
$region0: #{_lambda_.3}
  #allocation0 [shape = 'u32[]', space=smem, size = 0x4, offset = 0x4, fixed_abs, tag = 'smem constant byte address 0x4 - core index']
  #allocation1 [shape = 'u32[144,128]{1,0:T(1,128)}', space=vmem, size = 0x12000, scoped, tag = 'internal scratch']
  %s0 = inlined_call_operand.vmem [shape: bf16[2,32,64], index: 0, kind: input, shape index: {}]
  %s1 = inlined_call_operand.vmem [shape: bf16[216,256], index: 1, kind: input, shape index: {}]
  %s2 = inlined_call_operand.vmem [shape: f32[1,256], index: 2, kind: input, shape index: {}]
  %s3 = inlined_call_operand.vmem [shape: bf16[2,24,128], index: 3, kind: output, shape index: {}]
  %s4 = sld [smem:[#allocation0]]
  $region22: #{_lambda_.3} parent=0
    _
  %s6 = ssub.s32 1, %s4
  %s7 = scalar_select 0, %s6, %s4
  // Predicated region
  $region2: #{_lambda_.3} parent=0 // pred_check
    _
  $region3: #{_lambda_.3} parent=0 // pred_check_branch
    %9 = sbr.rel (0) target = $region5
  $region4: #{_lambda_.3} parent=0 // pred_region
    _
  $region5: #{_lambda_.3} parent=0 // pred_fallthru
    _
  // Predicated region
  $region6: #{_lambda_.3} parent=0 // pred_check
    _
  $region7: #{_lambda_.3} parent=0 // pred_check_branch
    %11 = sbr.rel (0) target = $region9
  $region8: #{_lambda_.3} parent=0 // pred_region
    _
  $region9: #{_lambda_.3} parent=0 // pred_fallthru
    _
  // Predicated region
  $region10: #{_lambda_.3} parent=0 // pred_check
    _
  $region11: #{_lambda_.3} parent=0 // pred_check_branch
    %13 = sbr.rel (0) target = $region13
  $region12: #{_lambda_.3} parent=0 // pred_region
    _
  $region13: #{_lambda_.3} parent=0 // pred_fallthru
    _
  %v15 = vld [vmem:[%s0] sm:$0x8]
  %v16 = vld [vmem:[%s0 + $0x4] sm:$0xf]
  %v17 = vld [vmem:[%s0 + $0x8] sm:$0xf]
  %v18 = vld [vmem:[%s0 + $0x10] sm:$0x8]
  %v19 = vld [vmem:[%s0 + $0x14] sm:$0xf]
  %v20 = vld [vmem:[%s0 + $0x18] sm:$0xf]
  %vm21 = vsmask.f32 256
  %vm22 = vsmask.f32 4368
  %vm23 = vmor %vm21, %vm22
  %v25 = vshrl.u32 %v15, 16
  %v27 = vrot.slane %v25, 7
  %v28 = vrot.slane %v27, 4
  %v30 = vshrl.u32 %v16, 16
  %v32 = vrot.slane %v30, 7
  %v33 = vshll.u32 %v16, 16
  %v35 = vor.u32 %v32, %v33
  %v36 = vsel %vm23, %v28, %v35
  %v37 = vrot.slane %v32, 4
  %v39 = vshrl.u32 %v17, 16
  %v41 = vrot.slane %v39, 7
  %v42 = vshll.u32 %v17, 16
  %v44 = vor.u32 %v41, %v42
  %v45 = vsel %vm23, %v37, %v44
  %v47 = vshrl.u32 %v18, 16
  %v49 = vrot.slane %v47, 7
  %v50 = vrot.slane %v49, 4
  %v52 = vshrl.u32 %v19, 16
  %v54 = vrot.slane %v52, 7
  %v55 = vshll.u32 %v19, 16
  %v57 = vor.u32 %v54, %v55
  %v58 = vsel %vm23, %v50, %v57
  %v59 = vrot.slane %v54, 4
  %v61 = vshrl.u32 %v20, 16
  %v63 = vrot.slane %v61, 7
  %v64 = vshll.u32 %v20, 16
  %v66 = vor.u32 %v63, %v64
  %v67 = vsel %vm23, %v59, %v66
  %v68 = vld [vmem:[%s0 + $0xc] sm:$0x1]
  %v69 = vld [vmem:[%s0 + $0x1c] sm:$0x1]
  %vm70 = vsmask.f32 3328
  %vm71 = vsmask.f32 7440
  %vm72 = vmor %vm70, %vm71
  %v73 = vrot.slane %v30, 4
  %v74 = vrot.slane %v33, 5
  %v75 = vor.u32 %v73, %v74
  %v76 = vrot.slane %v75, 4
  %v77 = vrot.slane %v42, 5
  %v78 = vsel %vm72, %v76, %v77
  %v79 = vrot.slane %v39, 4
  %v80 = vor.u32 %v79, %v77
  %v81 = vrot.slane %v80, 4
  %v83 = vshll.u32 %v68, 16
  %v85 = vrot.slane %v83, 5
  %v86 = vsel %vm72, %v81, %v85
  %v87 = vrot.slane %v52, 4
  %v88 = vrot.slane %v55, 5
  %v89 = vor.u32 %v87, %v88
  %v90 = vrot.slane %v89, 4
  %v91 = vrot.slane %v64, 5
  %v92 = vsel %vm72, %v90, %v91
  %v93 = vrot.slane %v61, 4
  %v94 = vor.u32 %v93, %v91
  %v95 = vrot.slane %v94, 4
  %v97 = vshll.u32 %v69, 16
  %v99 = vrot.slane %v97, 5
  %v100 = vsel %vm72, %v95, %v99
  %v101 = vunpack.c.l.b16 %v36
  %v102 = vunpack.c.l.b16 %v45
  %v103 = vunpack.c.l.b16 %v58
  %v104 = vunpack.c.l.b16 %v67
  %v105 = vpack.c.b16 %v102, %v101
  %v106 = vpack.c.b16 %v104, %v103
  %107 = vrot.lane.b32.xlu0 %v105, 4
  %v108 = vpop.permute.xlu0 %107
  %109 = vrot.lane.b32.xlu0 %v106, 4
  %v110 = vpop.permute.xlu0 %109
  %v115 = vunpack.c.l.b16 %v16
  %v116 = vunpack.c.l.b16 %v17
  %v117 = vunpack.c.l.b16 %v19
  %v118 = vunpack.c.l.b16 %v20
  %v119 = vpack.c.b16 %v116, %v115
  %v120 = vpack.c.b16 %v118, %v117
  %121 = vrot.lane.b32.xlu0 %v119, 76
  %v122 = vpop.permute.xlu0 %121
  %123 = vrot.lane.b32.xlu0 %v120, 76
  %v124 = vpop.permute.xlu0 %123
  %v125 = vunpack.c.l.b16 %v78
  %v126 = vunpack.c.l.b16 %v86
  %v127 = vunpack.c.l.b16 %v92
  %v128 = vunpack.c.l.b16 %v100
  %v129 = vpack.c.b16 %v126, %v125
  %v130 = vpack.c.b16 %v128, %v127
  %131 = vrot.lane.b32.xlu0 %v129, 20
  %v132 = vpop.permute.xlu0 %131
  %133 = vrot.lane.b32.xlu0 %v130, 20
  %v134 = vpop.permute.xlu0 %133
  %vm135 = vcmask 31744
  %v138 = vsel %vm135, 0, %v108
  %v140 = vsel %vm135, 0, %v110
  %vm141 = vcmask 556032
  %v142 = vsel %vm141, %v138, 0
  %v143 = vsel %vm141, %v140, 0
  %vm144 = vcmask 588800
  %v145 = vsel %vm144, %v142, 0
  %v146 = vsel %vm144, %v143, 0
  %vm147 = vcmask 621568
  %v149 = vsel %vm147, %v145, %v122
  %v152 = vsel %vm147, %v146, %v124
  %vm154 = vcmask 97280
  %v155 = vsel %vm154, %v122, 0
  %v156 = vsel %vm154, %v124, 0
  %vm157 = vcmask 130048
  %v158 = vsel %vm157, %v155, 0
  %v159 = vsel %vm157, %v156, 0
  %vm160 = vcmask 162816
  %v162 = vsel %vm160, %v158, %v132
  %v164 = vsel %vm160, %v159, %v134
  %vm165 = vcmask 687104
  %v166 = vsel %vm165, %v162, 0
  %v167 = vsel %vm165, %v164, 0
  %v168 = vld [vmem:[%s1] sm:$0xff]
  %v169 = vld [vmem:[%s1 + $0x8] sm:$0xff]
  %v170 = vld [vmem:[%s1 + $0x10] sm:$0xff]
  %v171 = vld [vmem:[%s1 + $0x18] sm:$0xff]
  %v172 = vld [vmem:[%s1 + $0x20] sm:$0xff]
  %v173 = vld [vmem:[%s1 + $0x28] sm:$0xff]
  %v174 = vld [vmem:[%s1 + $0x30] sm:$0xff]
  %v175 = vld [vmem:[%s1 + $0x38] sm:$0xff]
  %v176 = vld [vmem:[%s1 + $0x40] sm:$0xff]
  %v177 = vld [vmem:[%s1 + $0x48] sm:$0xff]
  %v178 = vld [vmem:[%s1 + $0x50] sm:$0xff]
  %v179 = vld [vmem:[%s1 + $0x58] sm:$0xff]
  %v180 = vld [vmem:[%s1 + $0x60] sm:$0xff]
  %v181 = vld [vmem:[%s1 + $0x68] sm:$0xff]
  %v182 = vld [vmem:[%s1 + $0x70] sm:$0xff]
  %v183 = vld [vmem:[%s1 + $0x78] sm:$0xff]
  %v184 = vld [vmem:[%s1 + $0x80] sm:$0xff]
  %v185 = vld [vmem:[%s1 + $0x88] sm:$0xff]
  %v186 = vld [vmem:[%s1 + $0x90] sm:$0xff]
  %v187 = vld [vmem:[%s1 + $0x98] sm:$0xff]
  %v188 = vld [vmem:[%s1 + $0xa0] sm:$0xff]
  %v189 = vld [vmem:[%s1 + $0xa8] sm:$0xff]
  %v190 = vld [vmem:[%s1 + $0xb0] sm:$0xff]
  %v191 = vld [vmem:[%s1 + $0xb8] sm:$0xff]
  %v192 = vld [vmem:[%s1 + $0xc0] sm:$0xff]
  %v193 = vld [vmem:[%s1 + $0xc8] sm:$0xff]
  %v194 = vld [vmem:[%s1 + $0xd0] sm:$0xff]
  %v195 = vld [vmem:[%s2] sm:$0x3]
  %v197 = vlaneseq
  %v198 = vshrl.u32 %v197, 7
  %v199 = vsub.s32 0, %v198
  %v200 = vrot.slane %v195, %v199
  %v201 = vlaneseq
  %v202 = vshrl.u32 %v201, 7
  %v203 = vsub.s32 1, %v202
  %v204 = vrot.slane %v195, %v203
  %v234 = vunpack.c.l.b16 %v168
  %v235 = vunpack.c.h.b16 %v168
  %v236 = vunpack.c.l.b16 %v169
  %v237 = vunpack.c.h.b16 %v169
  %v238 = vunpack.c.l.b16 %v170
  %v239 = vunpack.c.h.b16 %v170
  %v240 = vunpack.c.l.b16 %v171
  %v241 = vunpack.c.h.b16 %v171
  %v242 = vunpack.c.l.b16 %v172
  %v243 = vunpack.c.h.b16 %v172
  %v244 = vunpack.c.l.b16 %v173
  %v245 = vunpack.c.h.b16 %v173
  %v246 = vunpack.c.l.b16 %v174
  %v247 = vunpack.c.h.b16 %v174
  %v248 = vunpack.c.l.b16 %v175
  %v249 = vunpack.c.h.b16 %v175
  %v250 = vunpack.c.l.b16 %v176
  %v251 = vunpack.c.h.b16 %v176
  %v252 = vunpack.c.l.b16 %v177
  %v253 = vunpack.c.h.b16 %v177
  %v254 = vunpack.c.l.b16 %v178
  %v255 = vunpack.c.h.b16 %v178
  %v256 = vunpack.c.l.b16 %v179
  %v257 = vunpack.c.h.b16 %v179
  %v258 = vunpack.c.l.b16 %v180
  %v259 = vunpack.c.h.b16 %v180
  %v260 = vunpack.c.l.b16 %v181
  %v261 = vunpack.c.h.b16 %v181
  %v262 = vunpack.c.l.b16 %v182
  %v263 = vunpack.c.h.b16 %v182
  %v264 = vunpack.c.l.b16 %v183
  %v265 = vunpack.c.h.b16 %v183
  %v266 = vunpack.c.l.b16 %v184
  %v267 = vunpack.c.h.b16 %v184
  %v268 = vunpack.c.l.b16 %v185
  %v269 = vunpack.c.h.b16 %v185
  %v270 = vunpack.c.l.b16 %v186
  %v271 = vunpack.c.h.b16 %v186
  %v272 = vunpack.c.l.b16 %v187
  %v273 = vunpack.c.h.b16 %v187
  %v274 = vunpack.c.l.b16 %v188
  %v275 = vunpack.c.h.b16 %v188
  %v276 = vunpack.c.l.b16 %v189
  %v277 = vunpack.c.h.b16 %v189
  %v278 = vunpack.c.l.b16 %v190
  %v279 = vunpack.c.h.b16 %v190
  %v280 = vunpack.c.l.b16 %v191
  %v281 = vunpack.c.h.b16 %v191
  %v282 = vunpack.c.l.b16 %v192
  %v283 = vunpack.c.h.b16 %v192
  %v284 = vunpack.c.l.b16 %v193
  %v285 = vunpack.c.h.b16 %v193
  %v286 = vunpack.c.l.b16 %v194
  %v287 = vunpack.c.h.b16 %v194
  %v288 = vpack.c.b16 %v236, %v234
  %v289 = vpack.c.b16 %v237, %v235
  %v290 = vpack.c.b16 %v240, %v238
  %v291 = vpack.c.b16 %v241, %v239
  %v292 = vpack.c.b16 %v244, %v242
  %v293 = vpack.c.b16 %v245, %v243
  %v294 = vpack.c.b16 %v248, %v246
  %v295 = vpack.c.b16 %v249, %v247
  %v296 = vpack.c.b16 %v252, %v250
  %v297 = vpack.c.b16 %v253, %v251
  %v298 = vpack.c.b16 %v256, %v254
  %v299 = vpack.c.b16 %v257, %v255
  %v300 = vpack.c.b16 %v260, %v258
  %v301 = vpack.c.b16 %v261, %v259
  %v302 = vpack.c.b16 %v264, %v262
  %v303 = vpack.c.b16 %v265, %v263
  %v304 = vpack.c.b16 %v268, %v266
  %v305 = vpack.c.b16 %v269, %v267
  %v306 = vpack.c.b16 %v272, %v270
  %v307 = vpack.c.b16 %v273, %v271
  %v308 = vpack.c.b16 %v276, %v274
  %v309 = vpack.c.b16 %v277, %v275
  %v310 = vpack.c.b16 %v280, %v278
  %v311 = vpack.c.b16 %v281, %v279
  %v312 = vpack.c.b16 %v284, %v282
  %v313 = vpack.c.b16 %v285, %v283
  %v314 = vpack.c.b16 %v286, %v286
  %v315 = vpack.c.b16 %v287, %v287
  %vm342 = vcmask 719872
  %v343 = vsel %vm342, %v166, 0
  %v345 = vsel %vm342, %v167, 0
  %vm347 = vcmask 1043456
  %v349 = vsel %vm347, %v314, 0
  %v352 = vsel %vm347, %v315, 0
  %354 = vmatprep.subr.bf16.mxu0 %v303
  %355 = vmatpush1.bf16.msra.mxu0 %v302
  %356 = vmatprep.subr.bf16.mxu0 %v301
  %357 = vmatpush1.bf16.msra.mxu0 %v300
  %358 = vmatprep.subr.bf16.mxu0 %v299
  %359 = vmatpush1.bf16.msra.mxu0 %v298
  %360 = vmatprep.subr.bf16.mxu0 %v297
  %361 = vmatpush1.bf16.msra.mxu0 %v296
  %362 = vmatprep.subr.bf16.mxu0 %v295
  %363 = vmatpush1.bf16.msra.mxu0 %v294
  %364 = vmatprep.subr.bf16.mxu0 %v293
  %365 = vmatpush1.bf16.msra.mxu0 %v292
  %366 = vmatprep.subr.bf16.mxu0 %v291
  %367 = vmatpush1.bf16.msra.mxu0 %v290
  %368 = vmatprep.subr.bf16.mxu0 %v289
  %369 = vmatpush1.bf16.msra.mxu0 %v288
  %370 = vmatprep.subr.bf16.mxu0 0
  %371 = vmatpush2.bf16.msra.mxu0 0
  %372 = vmatprep.subr.bf16.mxu0 0
  %373 = vmatpush2.bf16.msra.mxu0 0
  %374 = vmatprep.subr.bf16.mxu0 %v352
  %375 = vmatpush2.bf16.msra.mxu0 %v349
  %376 = vmatprep.subr.bf16.mxu0 %v313
  %377 = vmatpush2.bf16.msra.mxu0 %v312
  %378 = vmatprep.subr.bf16.mxu0 %v311
  %379 = vmatpush2.bf16.msra.mxu0 %v310
  %380 = vmatprep.subr.bf16.mxu0 %v309
  %381 = vmatpush2.bf16.msra.mxu0 %v308
  %382 = vmatprep.subr.bf16.mxu0 %v307
  %383 = vmatpush2.bf16.msra.mxu0 %v306
  %384 = vmatprep.subr.bf16.mxu0 %v305
  %385 = vmatpush2.bf16.msra.mxu0 %v304
  %386 = vmatprep.mubr.bf16.mxu0 %v343
  %387 = vmatmul.mubr.bf16.gmra.mxu0 %v149
  %v388 = vpop.f32.mrf.mxu0
  %v389 = vadd.f32 %v200, %v388
  %v390 = vpop.f32.mrf.mxu0
  %v391 = vadd.f32 %v204, %v390
  %v392 = vpop.f32.mrf.mxu0
  %v393 = vadd.f32 %v200, %v392
  %v394 = vpop.f32.mrf.mxu0
  %v395 = vadd.f32 %v204, %v394
  %396 = vmatprep.mubr.bf16.mxu0 %v345
  %397 = vmatmul.mubr.bf16.gmra.mxu0 %v152
  %v398 = vpop.f32.mrf.mxu0
  %v399 = vadd.f32 %v200, %v398
  %v400 = vpop.f32.mrf.mxu0
  %v401 = vadd.f32 %v204, %v400
  %v402 = vpop.f32.mrf.mxu0
  %v403 = vadd.f32 %v200, %v402
  %v404 = vpop.f32.mrf.mxu0
  %v405 = vadd.f32 %v204, %v404
  %406 = vdwg.mxu0
  %v407 = vmax.f32 %v389, 0.0
  %v408 = vmax.f32 %v391, 0.0
  %v409 = vmax.f32 %v393, 0.0
  %v410 = vmax.f32 %v395, 0.0
  %v411 = vmax.f32 %v399, 0.0
  %v412 = vmax.f32 %v401, 0.0
  %v413 = vmax.f32 %v403, 0.0
  %v414 = vmax.f32 %v405, 0.0
  %v415 = vmax.f32 %v407, %v408
  %v416 = vmax.f32 %v409, %v410
  %v417 = vmax.f32 %v411, %v412
  %v418 = vmax.f32 %v413, %v414
  %v423 = vcombine.high %v415, %v415
  %v425 = vunpack.c.l.s4 1983009808
  %v426 = vunpack.c.0.s8 %v425
  %v427 = vlaneseq
  %v428 = vshrl.u32 %v427, 7
  %v429 = vsub.s32 %v426, %v428
  %v430 = vrot.slane %v415, %v429
  %v432 = vunpack.c.l.s4 1983009808
  %v433 = vunpack.c.0.s8 %v432
  %v434 = vlaneseq
  %v435 = vshrl.u32 %v434, 7
  %v436 = vsub.s32 %v433, %v435
  %v437 = vrot.slane %v423, %v436
  %v438 = vcombine.high %v430, %v430
  %v439 = vcombine.high %v437, %v437
  %v440 = vcombine.high %v416, %v416
  %v442 = vunpack.c.l.s4 1983009808
  %v443 = vunpack.c.0.s8 %v442
  %v444 = vlaneseq
  %v445 = vshrl.u32 %v444, 7
  %v446 = vsub.s32 %v443, %v445
  %v447 = vrot.slane %v416, %v446
  %v449 = vunpack.c.l.s4 1983009808
  %v450 = vunpack.c.0.s8 %v449
  %v451 = vlaneseq
  %v452 = vshrl.u32 %v451, 7
  %v453 = vsub.s32 %v450, %v452
  %v454 = vrot.slane %v440, %v453
  %v455 = vcombine.high %v447, %v447
  %v456 = vcombine.high %v454, %v454
  %v457 = vcombine.high %v417, %v417
  %v459 = vunpack.c.l.s4 1983009808
  %v460 = vunpack.c.0.s8 %v459
  %v461 = vlaneseq
  %v462 = vshrl.u32 %v461, 7
  %v463 = vsub.s32 %v460, %v462
  %v464 = vrot.slane %v417, %v463
  %v466 = vunpack.c.l.s4 1983009808
  %v467 = vunpack.c.0.s8 %v466
  %v468 = vlaneseq
  %v469 = vshrl.u32 %v468, 7
  %v470 = vsub.s32 %v467, %v469
  %v471 = vrot.slane %v457, %v470
  %v472 = vcombine.high %v464, %v464
  %v473 = vcombine.high %v471, %v471
  %v474 = vcombine.high %v418, %v418
  %v476 = vunpack.c.l.s4 1983009808
  %v477 = vunpack.c.0.s8 %v476
  %v478 = vlaneseq
  %v479 = vshrl.u32 %v478, 7
  %v480 = vsub.s32 %v477, %v479
  %v481 = vrot.slane %v418, %v480
  %v483 = vunpack.c.l.s4 1983009808
  %v484 = vunpack.c.0.s8 %v483
  %v485 = vlaneseq
  %v486 = vshrl.u32 %v485, 7
  %v487 = vsub.s32 %v484, %v486
  %v488 = vrot.slane %v474, %v487
  %v489 = vcombine.high %v481, %v481
  %v490 = vcombine.high %v488, %v488
  %v507 = vrot.slane %v430, 7
  %v508 = vrot.slane %v507, 2
  %v509 = vrot.slane %v438, 7
  %v510 = vrot.slane %v509, 2
  %v511 = vrot.slane %v437, 7
  %v512 = vrot.slane %v511, 2
  %v513 = vrot.slane %v439, 7
  %v514 = vrot.slane %v513, 2
  %v515 = vrot.slane %v447, 7
  %v516 = vrot.slane %v515, 2
  %v517 = vrot.slane %v455, 7
  %v518 = vrot.slane %v517, 2
  %v519 = vrot.slane %v454, 7
  %v520 = vrot.slane %v519, 2
  %v521 = vrot.slane %v456, 7
  %v522 = vrot.slane %v521, 2
  %v523 = vrot.slane %v464, 7
  %v524 = vrot.slane %v523, 2
  %v525 = vrot.slane %v472, 7
  %v526 = vrot.slane %v525, 2
  %v527 = vrot.slane %v471, 7
  %v528 = vrot.slane %v527, 2
  %v529 = vrot.slane %v473, 7
  %v530 = vrot.slane %v529, 2
  %v531 = vrot.slane %v481, 7
  %v532 = vrot.slane %v531, 2
  %v533 = vrot.slane %v489, 7
  %v534 = vrot.slane %v533, 2
  %v535 = vrot.slane %v488, 7
  %v536 = vrot.slane %v535, 2
  %v537 = vrot.slane %v490, 7
  %v538 = vrot.slane %v537, 2
  %v555 = vmax.f32 %v430, %v508
  %v556 = vmax.f32 %v438, %v510
  %v557 = vmax.f32 %v437, %v512
  %v558 = vmax.f32 %v439, %v514
  %v559 = vmax.f32 %v447, %v516
  %v560 = vmax.f32 %v455, %v518
  %v561 = vmax.f32 %v454, %v520
  %v562 = vmax.f32 %v456, %v522
  %v563 = vmax.f32 %v464, %v524
  %v564 = vmax.f32 %v472, %v526
  %v565 = vmax.f32 %v471, %v528
  %v566 = vmax.f32 %v473, %v530
  %v567 = vmax.f32 %v481, %v532
  %v568 = vmax.f32 %v489, %v534
  %v569 = vmax.f32 %v488, %v536
  %v570 = vmax.f32 %v490, %v538
  %v571 = vpack.c.bf16 %v555, %v555
  %v572 = vpack.c.bf16 %v556, %v556
  %v573 = vpack.c.bf16 %v557, %v557
  %v574 = vpack.c.bf16 %v558, %v558
  %v575 = vpack.c.bf16 %v559, %v559
  %v576 = vpack.c.bf16 %v560, %v560
  %v577 = vpack.c.bf16 %v561, %v561
  %v578 = vpack.c.bf16 %v562, %v562
  %v579 = vpack.c.bf16 %v563, %v563
  %v580 = vpack.c.bf16 %v564, %v564
  %v581 = vpack.c.bf16 %v565, %v565
  %v582 = vpack.c.bf16 %v566, %v566
  %v583 = vpack.c.bf16 %v567, %v567
  %v584 = vpack.c.bf16 %v568, %v568
  %v585 = vpack.c.bf16 %v569, %v569
  %v586 = vpack.c.bf16 %v570, %v570
  %587 = vst [vmem:[%s3] sm:$0xf] 0
  %588 = vst [vmem:[%s3 + $0xc] sm:$0xf] 0
  %589 = vst [vmem:[%s3 + $0x8] sm:$0xf] 0
  %590 = vst [vmem:[%s3 + $0x14] sm:$0xf] 0
  %v607 = vunpack.c.l.b16 %v571
  %v608 = vunpack.c.l.b16 %v572
  %v609 = vunpack.c.l.b16 %v573
  %v610 = vunpack.c.l.b16 %v574
  %v611 = vunpack.c.l.b16 %v575
  %v612 = vunpack.c.l.b16 %v576
  %v613 = vunpack.c.l.b16 %v577
  %v614 = vunpack.c.l.b16 %v578
  %v615 = vunpack.c.l.b16 %v579
  %v616 = vunpack.c.l.b16 %v580
  %v617 = vunpack.c.l.b16 %v581
  %v618 = vunpack.c.l.b16 %v582
  %v619 = vunpack.c.l.b16 %v583
  %v620 = vunpack.c.l.b16 %v584
  %v621 = vunpack.c.l.b16 %v585
  %v622 = vunpack.c.l.b16 %v586
  %v623 = vpack.c.b16 %v607, %v607
  %v624 = vpack.c.b16 %v608, %v608
  %v625 = vpack.c.b16 %v609, %v609
  %v626 = vpack.c.b16 %v610, %v610
  %v627 = vpack.c.b16 %v611, %v611
  %v628 = vpack.c.b16 %v612, %v612
  %v629 = vpack.c.b16 %v613, %v613
  %v630 = vpack.c.b16 %v614, %v614
  %v631 = vpack.c.b16 %v615, %v615
  %v632 = vpack.c.b16 %v616, %v616
  %v633 = vpack.c.b16 %v617, %v617
  %v634 = vpack.c.b16 %v618, %v618
  %v635 = vpack.c.b16 %v619, %v619
  %v636 = vpack.c.b16 %v620, %v620
  %v637 = vpack.c.b16 %v621, %v621
  %v638 = vpack.c.b16 %v622, %v622
  %v639 = vunpack.c.l.b16 %v623
  %v640 = vunpack.c.l.b16 %v624
  %v641 = vunpack.c.l.b16 %v625
  %v642 = vunpack.c.l.b16 %v626
  %v643 = vunpack.c.l.b16 %v627
  %v644 = vunpack.c.l.b16 %v628
  %v645 = vunpack.c.l.b16 %v629
  %v646 = vunpack.c.l.b16 %v630
  %v647 = vunpack.c.l.b16 %v631
  %v648 = vunpack.c.l.b16 %v632
  %v649 = vunpack.c.l.b16 %v633
  %v650 = vunpack.c.l.b16 %v634
  %v651 = vunpack.c.l.b16 %v635
  %v652 = vunpack.c.l.b16 %v636
  %v653 = vunpack.c.l.b16 %v637
  %v654 = vunpack.c.l.b16 %v638
  %v655 = vrot.slane %v640, 7
  %vm656 = vcmask 1041409
  %v657 = vsel %vm656, %v655, %v639
  %v658 = vrot.slane %v641, 6
  %vm659 = vcmask 1042434
  %v660 = vsel %vm659, %v658, %v657
  %v661 = vrot.slane %v642, 5
  %vm662 = vcmask 1043459
  %v663 = vsel %vm662, %v661, %v660
  %v664 = vrot.slane %v643, 4
  %vm665 = vcmask 1044484
  %v666 = vsel %vm665, %v664, %v663
  %v667 = vrot.slane %v644, 3
  %vm668 = vcmask 1045509
  %v669 = vsel %vm668, %v667, %v666
  %v670 = vrot.slane %v645, 2
  %vm671 = vcmask 1046534
  %v672 = vsel %vm671, %v670, %v669
  %v673 = vrot.slane %v646, 1
  %vm674 = vcmask 1047559
  %v675 = vsel %vm674, %v673, %v672
  %v676 = vrot.slane %v648, 7
  %v677 = vsel %vm656, %v676, %v647
  %v678 = vrot.slane %v649, 6
  %v679 = vsel %vm659, %v678, %v677
  %v680 = vrot.slane %v650, 5
  %v681 = vsel %vm662, %v680, %v679
  %v682 = vrot.slane %v651, 4
  %v683 = vsel %vm665, %v682, %v681
  %v684 = vrot.slane %v652, 3
  %v685 = vsel %vm668, %v684, %v683
  %v686 = vrot.slane %v653, 2
  %v687 = vsel %vm671, %v686, %v685
  %v688 = vrot.slane %v654, 1
  %v689 = vsel %vm674, %v688, %v687
  %v690 = vpack.c.b16 %v675, %v675
  %v691 = vpack.c.b16 %v689, %v689
  %694 = vst [vmem:[%s3 + $0x4] sm:$0xf] %v690
  %695 = vst [vmem:[%s3 + $0x10] sm:$0xf] %v691
  // Predicated region
  $region14: #{_lambda_.3} parent=0 // pred_check
    _
  $region15: #{_lambda_.3} parent=0 // pred_check_branch
    %697 = sbr.rel (0) target = $region17
  $region16: #{_lambda_.3} parent=0 // pred_region
    _
  $region17: #{_lambda_.3} parent=0 // pred_fallthru
    _
  // Predicated region
  $region18: #{_lambda_.3} parent=0 // pred_check
    _
  $region19: #{_lambda_.3} parent=0 // pred_check_branch
    %699 = sbr.rel (0) target = $region21
  $region20: #{_lambda_.3} parent=0 // pred_region
    _
  $region21: #{_lambda_.3} parent=0 // pred_fallthru
    _

// kernel: _lambda_.4
$region0: #{_lambda_.4}
  #allocation0 [shape = 'u32[]', space=smem, size = 0x4, offset = 0x4, fixed_abs, tag = 'smem constant byte address 0x4 - core index']
  #allocation1 [shape = 'u32[144,128]{1,0:T(1,128)}', space=vmem, size = 0x12000, scoped, tag = 'internal scratch']
  %s0 = inlined_call_operand.vmem [shape: bf16[2,24,128], index: 0, kind: input, shape index: {}]
  %s1 = inlined_call_operand.vmem [shape: bf16[480,256], index: 1, kind: input, shape index: {}]
  %s2 = inlined_call_operand.vmem [shape: f32[1,256], index: 2, kind: input, shape index: {}]
  %s3 = inlined_call_operand.vmem [shape: bf16[2,4,128], index: 3, kind: output, shape index: {}]
  %s4 = sld [smem:[#allocation0]]
  $region22: #{_lambda_.4} parent=0
    _
  %s6 = ssub.s32 1, %s4
  %s7 = scalar_select 0, %s6, %s4
  // Predicated region
  $region2: #{_lambda_.4} parent=0 // pred_check
    _
  $region3: #{_lambda_.4} parent=0 // pred_check_branch
    %9 = sbr.rel (0) target = $region5
  $region4: #{_lambda_.4} parent=0 // pred_region
    _
  $region5: #{_lambda_.4} parent=0 // pred_fallthru
    _
  // Predicated region
  $region6: #{_lambda_.4} parent=0 // pred_check
    _
  $region7: #{_lambda_.4} parent=0 // pred_check_branch
    %11 = sbr.rel (0) target = $region9
  $region8: #{_lambda_.4} parent=0 // pred_region
    _
  $region9: #{_lambda_.4} parent=0 // pred_fallthru
    _
  // Predicated region
  $region10: #{_lambda_.4} parent=0 // pred_check
    _
  $region11: #{_lambda_.4} parent=0 // pred_check_branch
    %13 = sbr.rel (0) target = $region13
  $region12: #{_lambda_.4} parent=0 // pred_region
    _
  $region13: #{_lambda_.4} parent=0 // pred_fallthru
    _
  %v15 = vld [vmem:[%s0] sm:$0x8]
  %v16 = vld [vmem:[%s0 + $0x4] sm:$0xf]
  %v17 = vld [vmem:[%s0 + $0xc] sm:$0x8]
  %v18 = vld [vmem:[%s0 + $0x10] sm:$0xf]
  %vm19 = vsmask.f32 256
  %vm20 = vsmask.f32 4368
  %vm21 = vmor %vm19, %vm20
  %v23 = vshrl.u32 %v15, 16
  %v25 = vrot.slane %v23, 7
  %v26 = vrot.slane %v25, 4
  %v28 = vshrl.u32 %v16, 16
  %v30 = vrot.slane %v28, 7
  %v31 = vshll.u32 %v16, 16
  %v33 = vor.u32 %v30, %v31
  %v34 = vsel %vm21, %v26, %v33
  %v36 = vshrl.u32 %v17, 16
  %v38 = vrot.slane %v36, 7
  %v39 = vrot.slane %v38, 4
  %v41 = vshrl.u32 %v18, 16
  %v43 = vrot.slane %v41, 7
  %v44 = vshll.u32 %v18, 16
  %v46 = vor.u32 %v43, %v44
  %v47 = vsel %vm21, %v39, %v46
  %v48 = vld [vmem:[%s0 + $0x4] sm:$0xf]
  %v49 = vld [vmem:[%s0 + $0x8] sm:$0x1]
  %v50 = vld [vmem:[%s0 + $0x10] sm:$0xf]
  %v51 = vld [vmem:[%s0 + $0x14] sm:$0x1]
  %vm52 = vsmask.f32 3328
  %vm53 = vsmask.f32 7440
  %vm54 = vmor %vm52, %vm53
  %v56 = vshrl.u32 %v48, 16
  %v58 = vrot.slane %v56, 4
  %v59 = vshll.u32 %v48, 16
  %v61 = vrot.slane %v59, 5
  %v62 = vor.u32 %v58, %v61
  %v63 = vrot.slane %v62, 4
  %v65 = vshll.u32 %v49, 16
  %v67 = vrot.slane %v65, 5
  %v68 = vsel %vm54, %v63, %v67
  %v70 = vshrl.u32 %v50, 16
  %v72 = vrot.slane %v70, 4
  %v73 = vshll.u32 %v50, 16
  %v75 = vrot.slane %v73, 5
  %v76 = vor.u32 %v72, %v75
  %v77 = vrot.slane %v76, 4
  %v79 = vshll.u32 %v51, 16
  %v81 = vrot.slane %v79, 5
  %v82 = vsel %vm54, %v77, %v81
  %v83 = vunpack.c.l.b16 %v34
  %v84 = vunpack.c.l.b16 %v47
  %v85 = vpack.c.b16 %v84, %v83
  %86 = vrot.lane.b32.xlu0 %v85, 16
  %v87 = vpop.permute.xlu0 %86
  %v90 = vunpack.c.l.b16 %v16
  %v91 = vunpack.c.l.b16 %v18
  %v92 = vpack.c.b16 %v91, %v90
  %93 = vrot.lane.b32.xlu0 %v92, 48
  %v94 = vpop.permute.xlu0 %93
  %v95 = vunpack.c.l.b16 %v68
  %v96 = vunpack.c.l.b16 %v82
  %v97 = vpack.c.b16 %v96, %v95
  %98 = vrot.lane.b32.xlu0 %v97, 80
  %v99 = vpop.permute.xlu0 %98
  %vm100 = vcmask 130048
  %v103 = vsel %vm100, 0, %v87
  %v105 = vsel %vm100, %v87, 0
  %vm106 = vcmask 261120
  %v107 = vsel %vm106, %v105, 0
  %vm108 = vcmask 392192
  %v110 = vsel %vm108, %v107, %v94
  %v112 = vsel %vm108, %v94, 0
  %vm113 = vcmask 523264
  %v114 = vsel %vm113, %v112, 0
  %vm115 = vcmask 654336
  %v117 = vsel %vm115, %v114, %v99
  %v119 = vsel %vm115, %v99, 0
  %v120 = vld [vmem:[%s1] sm:$0xff]
  %v121 = vld [vmem:[%s1 + $0x8] sm:$0xff]
  %v122 = vld [vmem:[%s1 + $0x10] sm:$0xff]
  %v123 = vld [vmem:[%s1 + $0x18] sm:$0xff]
  %v124 = vld [vmem:[%s1 + $0x20] sm:$0xff]
  %v125 = vld [vmem:[%s1 + $0x28] sm:$0xff]
  %v126 = vld [vmem:[%s1 + $0x30] sm:$0xff]
  %v127 = vld [vmem:[%s1 + $0x38] sm:$0xff]
  %v128 = vld [vmem:[%s1 + $0x40] sm:$0xff]
  %v129 = vld [vmem:[%s1 + $0x48] sm:$0xff]
  %v130 = vld [vmem:[%s1 + $0x50] sm:$0xff]
  %v131 = vld [vmem:[%s1 + $0x58] sm:$0xff]
  %v132 = vld [vmem:[%s1 + $0x60] sm:$0xff]
  %v133 = vld [vmem:[%s1 + $0x68] sm:$0xff]
  %v134 = vld [vmem:[%s1 + $0x70] sm:$0xff]
  %v135 = vld [vmem:[%s1 + $0x78] sm:$0xff]
  %v136 = vld [vmem:[%s1 + $0x80] sm:$0xff]
  %v137 = vld [vmem:[%s1 + $0x88] sm:$0xff]
  %v138 = vld [vmem:[%s1 + $0x90] sm:$0xff]
  %v139 = vld [vmem:[%s1 + $0x98] sm:$0xff]
  %v140 = vld [vmem:[%s1 + $0xa0] sm:$0xff]
  %v141 = vld [vmem:[%s1 + $0xa8] sm:$0xff]
  %v142 = vld [vmem:[%s1 + $0xb0] sm:$0xff]
  %v143 = vld [vmem:[%s1 + $0xb8] sm:$0xff]
  %v144 = vld [vmem:[%s1 + $0xc0] sm:$0xff]
  %v145 = vld [vmem:[%s1 + $0xc8] sm:$0xff]
  %v146 = vld [vmem:[%s1 + $0xd0] sm:$0xff]
  %v147 = vld [vmem:[%s1 + $0xd8] sm:$0xff]
  %v148 = vld [vmem:[%s1 + $0xe0] sm:$0xff]
  %v149 = vld [vmem:[%s1 + $0xe8] sm:$0xff]
  %v150 = vld [vmem:[%s1 + $0xf0] sm:$0xff]
  %v151 = vld [vmem:[%s1 + $0xf8] sm:$0xff]
  %v152 = vld [vmem:[%s1 + $0x100] sm:$0xff]
  %v153 = vld [vmem:[%s1 + $0x108] sm:$0xff]
  %v154 = vld [vmem:[%s1 + $0x110] sm:$0xff]
  %v155 = vld [vmem:[%s1 + $0x118] sm:$0xff]
  %v156 = vld [vmem:[%s1 + $0x120] sm:$0xff]
  %v157 = vld [vmem:[%s1 + $0x128] sm:$0xff]
  %v158 = vld [vmem:[%s1 + $0x130] sm:$0xff]
  %v159 = vld [vmem:[%s1 + $0x138] sm:$0xff]
  %v160 = vld [vmem:[%s1 + $0x140] sm:$0xff]
  %v161 = vld [vmem:[%s1 + $0x148] sm:$0xff]
  %v162 = vld [vmem:[%s1 + $0x150] sm:$0xff]
  %v163 = vld [vmem:[%s1 + $0x158] sm:$0xff]
  %v164 = vld [vmem:[%s1 + $0x160] sm:$0xff]
  %v165 = vld [vmem:[%s1 + $0x168] sm:$0xff]
  %v166 = vld [vmem:[%s1 + $0x170] sm:$0xff]
  %v167 = vld [vmem:[%s1 + $0x178] sm:$0xff]
  %v168 = vld [vmem:[%s1 + $0x180] sm:$0xff]
  %v169 = vld [vmem:[%s1 + $0x188] sm:$0xff]
  %v170 = vld [vmem:[%s1 + $0x190] sm:$0xff]
  %v171 = vld [vmem:[%s1 + $0x198] sm:$0xff]
  %v172 = vld [vmem:[%s1 + $0x1a0] sm:$0xff]
  %v173 = vld [vmem:[%s1 + $0x1a8] sm:$0xff]
  %v174 = vld [vmem:[%s1 + $0x1b0] sm:$0xff]
  %v175 = vld [vmem:[%s1 + $0x1b8] sm:$0xff]
  %v176 = vld [vmem:[%s1 + $0x1c0] sm:$0xff]
  %v177 = vld [vmem:[%s1 + $0x1c8] sm:$0xff]
  %v178 = vld [vmem:[%s1 + $0x1d0] sm:$0xff]
  %v179 = vld [vmem:[%s1 + $0x1d8] sm:$0xff]
  %v180 = vld [vmem:[%s2] sm:$0x3]
  %v182 = vlaneseq
  %v183 = vshrl.u32 %v182, 7
  %v184 = vsub.s32 0, %v183
  %v185 = vrot.slane %v180, %v184
  %v186 = vlaneseq
  %v187 = vshrl.u32 %v186, 7
  %v188 = vsub.s32 1, %v187
  %v189 = vrot.slane %v180, %v188
  %v252 = vunpack.c.l.b16 %v120
  %v253 = vunpack.c.h.b16 %v120
  %v254 = vunpack.c.l.b16 %v121
  %v255 = vunpack.c.h.b16 %v121
  %v256 = vunpack.c.l.b16 %v122
  %v257 = vunpack.c.h.b16 %v122
  %v258 = vunpack.c.l.b16 %v123
  %v259 = vunpack.c.h.b16 %v123
  %v260 = vunpack.c.l.b16 %v124
  %v261 = vunpack.c.h.b16 %v124
  %v262 = vunpack.c.l.b16 %v125
  %v263 = vunpack.c.h.b16 %v125
  %v264 = vunpack.c.l.b16 %v126
  %v265 = vunpack.c.h.b16 %v126
  %v266 = vunpack.c.l.b16 %v127
  %v267 = vunpack.c.h.b16 %v127
  %v268 = vunpack.c.l.b16 %v128
  %v269 = vunpack.c.h.b16 %v128
  %v270 = vunpack.c.l.b16 %v129
  %v271 = vunpack.c.h.b16 %v129
  %v272 = vunpack.c.l.b16 %v130
  %v273 = vunpack.c.h.b16 %v130
  %v274 = vunpack.c.l.b16 %v131
  %v275 = vunpack.c.h.b16 %v131
  %v276 = vunpack.c.l.b16 %v132
  %v277 = vunpack.c.h.b16 %v132
  %v278 = vunpack.c.l.b16 %v133
  %v279 = vunpack.c.h.b16 %v133
  %v280 = vunpack.c.l.b16 %v134
  %v281 = vunpack.c.h.b16 %v134
  %v282 = vunpack.c.l.b16 %v135
  %v283 = vunpack.c.h.b16 %v135
  %v284 = vunpack.c.l.b16 %v136
  %v285 = vunpack.c.h.b16 %v136
  %v286 = vunpack.c.l.b16 %v137
  %v287 = vunpack.c.h.b16 %v137
  %v288 = vunpack.c.l.b16 %v138
  %v289 = vunpack.c.h.b16 %v138
  %v290 = vunpack.c.l.b16 %v139
  %v291 = vunpack.c.h.b16 %v139
  %v292 = vunpack.c.l.b16 %v140
  %v293 = vunpack.c.h.b16 %v140
  %v294 = vunpack.c.l.b16 %v141
  %v295 = vunpack.c.h.b16 %v141
  %v296 = vunpack.c.l.b16 %v142
  %v297 = vunpack.c.h.b16 %v142
  %v298 = vunpack.c.l.b16 %v143
  %v299 = vunpack.c.h.b16 %v143
  %v300 = vunpack.c.l.b16 %v144
  %v301 = vunpack.c.h.b16 %v144
  %v302 = vunpack.c.l.b16 %v145
  %v303 = vunpack.c.h.b16 %v145
  %v304 = vunpack.c.l.b16 %v146
  %v305 = vunpack.c.h.b16 %v146
  %v306 = vunpack.c.l.b16 %v147
  %v307 = vunpack.c.h.b16 %v147
  %v308 = vunpack.c.l.b16 %v148
  %v309 = vunpack.c.h.b16 %v148
  %v310 = vunpack.c.l.b16 %v149
  %v311 = vunpack.c.h.b16 %v149
  %v312 = vunpack.c.l.b16 %v150
  %v313 = vunpack.c.h.b16 %v150
  %v314 = vunpack.c.l.b16 %v151
  %v315 = vunpack.c.h.b16 %v151
  %v316 = vunpack.c.l.b16 %v152
  %v317 = vunpack.c.h.b16 %v152
  %v318 = vunpack.c.l.b16 %v153
  %v319 = vunpack.c.h.b16 %v153
  %v320 = vunpack.c.l.b16 %v154
  %v321 = vunpack.c.h.b16 %v154
  %v322 = vunpack.c.l.b16 %v155
  %v323 = vunpack.c.h.b16 %v155
  %v324 = vunpack.c.l.b16 %v156
  %v325 = vunpack.c.h.b16 %v156
  %v326 = vunpack.c.l.b16 %v157
  %v327 = vunpack.c.h.b16 %v157
  %v328 = vunpack.c.l.b16 %v158
  %v329 = vunpack.c.h.b16 %v158
  %v330 = vunpack.c.l.b16 %v159
  %v331 = vunpack.c.h.b16 %v159
  %v332 = vunpack.c.l.b16 %v160
  %v333 = vunpack.c.h.b16 %v160
  %v334 = vunpack.c.l.b16 %v161
  %v335 = vunpack.c.h.b16 %v161
  %v336 = vunpack.c.l.b16 %v162
  %v337 = vunpack.c.h.b16 %v162
  %v338 = vunpack.c.l.b16 %v163
  %v339 = vunpack.c.h.b16 %v163
  %v340 = vunpack.c.l.b16 %v164
  %v341 = vunpack.c.h.b16 %v164
  %v342 = vunpack.c.l.b16 %v165
  %v343 = vunpack.c.h.b16 %v165
  %v344 = vunpack.c.l.b16 %v166
  %v345 = vunpack.c.h.b16 %v166
  %v346 = vunpack.c.l.b16 %v167
  %v347 = vunpack.c.h.b16 %v167
  %v348 = vunpack.c.l.b16 %v168
  %v349 = vunpack.c.h.b16 %v168
  %v350 = vunpack.c.l.b16 %v169
  %v351 = vunpack.c.h.b16 %v169
  %v352 = vunpack.c.l.b16 %v170
  %v353 = vunpack.c.h.b16 %v170
  %v354 = vunpack.c.l.b16 %v171
  %v355 = vunpack.c.h.b16 %v171
  %v356 = vunpack.c.l.b16 %v172
  %v357 = vunpack.c.h.b16 %v172
  %v358 = vunpack.c.l.b16 %v173
  %v359 = vunpack.c.h.b16 %v173
  %v360 = vunpack.c.l.b16 %v174
  %v361 = vunpack.c.h.b16 %v174
  %v362 = vunpack.c.l.b16 %v175
  %v363 = vunpack.c.h.b16 %v175
  %v364 = vunpack.c.l.b16 %v176
  %v365 = vunpack.c.h.b16 %v176
  %v366 = vunpack.c.l.b16 %v177
  %v367 = vunpack.c.h.b16 %v177
  %v368 = vunpack.c.l.b16 %v178
  %v369 = vunpack.c.h.b16 %v178
  %v370 = vunpack.c.l.b16 %v179
  %v371 = vunpack.c.h.b16 %v179
  %v372 = vpack.c.b16 %v254, %v252
  %v373 = vpack.c.b16 %v255, %v253
  %v374 = vpack.c.b16 %v258, %v256
  %v375 = vpack.c.b16 %v259, %v257
  %v376 = vpack.c.b16 %v262, %v260
  %v377 = vpack.c.b16 %v263, %v261
  %v378 = vpack.c.b16 %v266, %v264
  %v379 = vpack.c.b16 %v267, %v265
  %v380 = vpack.c.b16 %v270, %v268
  %v381 = vpack.c.b16 %v271, %v269
  %v382 = vpack.c.b16 %v274, %v272
  %v383 = vpack.c.b16 %v275, %v273
  %v384 = vpack.c.b16 %v278, %v276
  %v385 = vpack.c.b16 %v279, %v277
  %v386 = vpack.c.b16 %v282, %v280
  %v387 = vpack.c.b16 %v283, %v281
  %v388 = vpack.c.b16 %v286, %v284
  %v389 = vpack.c.b16 %v287, %v285
  %v390 = vpack.c.b16 %v290, %v288
  %v391 = vpack.c.b16 %v291, %v289
  %v392 = vpack.c.b16 %v294, %v292
  %v393 = vpack.c.b16 %v295, %v293
  %v394 = vpack.c.b16 %v298, %v296
  %v395 = vpack.c.b16 %v299, %v297
  %v396 = vpack.c.b16 %v302, %v300
  %v397 = vpack.c.b16 %v303, %v301
  %v398 = vpack.c.b16 %v306, %v304
  %v399 = vpack.c.b16 %v307, %v305
  %v400 = vpack.c.b16 %v310, %v308
  %v401 = vpack.c.b16 %v311, %v309
  %v402 = vpack.c.b16 %v314, %v312
  %v403 = vpack.c.b16 %v315, %v313
  %v404 = vpack.c.b16 %v318, %v316
  %v405 = vpack.c.b16 %v319, %v317
  %v406 = vpack.c.b16 %v322, %v320
  %v407 = vpack.c.b16 %v323, %v321
  %v408 = vpack.c.b16 %v326, %v324
  %v409 = vpack.c.b16 %v327, %v325
  %v410 = vpack.c.b16 %v330, %v328
  %v411 = vpack.c.b16 %v331, %v329
  %v412 = vpack.c.b16 %v334, %v332
  %v413 = vpack.c.b16 %v335, %v333
  %v414 = vpack.c.b16 %v338, %v336
  %v415 = vpack.c.b16 %v339, %v337
  %v416 = vpack.c.b16 %v342, %v340
  %v417 = vpack.c.b16 %v343, %v341
  %v418 = vpack.c.b16 %v346, %v344
  %v419 = vpack.c.b16 %v347, %v345
  %v420 = vpack.c.b16 %v350, %v348
  %v421 = vpack.c.b16 %v351, %v349
  %v422 = vpack.c.b16 %v354, %v352
  %v423 = vpack.c.b16 %v355, %v353
  %v424 = vpack.c.b16 %v358, %v356
  %v425 = vpack.c.b16 %v359, %v357
  %v426 = vpack.c.b16 %v362, %v360
  %v427 = vpack.c.b16 %v363, %v361
  %v428 = vpack.c.b16 %v366, %v364
  %v429 = vpack.c.b16 %v367, %v365
  %v430 = vpack.c.b16 %v370, %v368
  %v431 = vpack.c.b16 %v371, %v369
  %vm492 = vcmask 785408
  %v493 = vsel %vm492, %v119, 0
  %495 = vmatprep.subr.bf16.mxu0 %v387
  %496 = vmatpush1.bf16.msra.mxu0 %v386
  %497 = vmatprep.subr.bf16.mxu0 %v385
  %498 = vmatpush1.bf16.msra.mxu0 %v384
  %499 = vmatprep.subr.bf16.mxu0 %v383
  %500 = vmatpush1.bf16.msra.mxu0 %v382
  %501 = vmatprep.subr.bf16.mxu0 %v381
  %502 = vmatpush1.bf16.msra.mxu0 %v380
  %503 = vmatprep.subr.bf16.mxu0 %v379
  %504 = vmatpush1.bf16.msra.mxu0 %v378
  %505 = vmatprep.subr.bf16.mxu0 %v377
  %506 = vmatpush1.bf16.msra.mxu0 %v376
  %507 = vmatprep.subr.bf16.mxu0 %v375
  %508 = vmatpush1.bf16.msra.mxu0 %v374
  %509 = vmatprep.subr.bf16.mxu0 %v373
  %510 = vmatpush1.bf16.msra.mxu0 %v372
  %511 = vmatprep.subr.bf16.mxu0 %v403
  %512 = vmatpush2.bf16.msra.mxu0 %v402
  %513 = vmatprep.subr.bf16.mxu0 %v401
  %514 = vmatpush2.bf16.msra.mxu0 %v400
  %515 = vmatprep.subr.bf16.mxu0 %v399
  %516 = vmatpush2.bf16.msra.mxu0 %v398
  %517 = vmatprep.subr.bf16.mxu0 %v397
  %518 = vmatpush2.bf16.msra.mxu0 %v396
  %519 = vmatprep.subr.bf16.mxu0 %v395
  %520 = vmatpush2.bf16.msra.mxu0 %v394
  %521 = vmatprep.subr.bf16.mxu0 %v393
  %522 = vmatpush2.bf16.msra.mxu0 %v392
  %523 = vmatprep.subr.bf16.mxu0 %v391
  %524 = vmatpush2.bf16.msra.mxu0 %v390
  %525 = vmatprep.subr.bf16.mxu0 %v389
  %526 = vmatpush2.bf16.msra.mxu0 %v388
  %527 = vmatprep.mubr.bf16.mxu0 %v110
  %528 = vmatmul.mubr.bf16.gmra.mxu0 %v103
  %v529 = vpop.f32.mrf.mxu0
  %v530 = vadd.f32 %v185, %v529
  %v531 = vpop.f32.mrf.mxu0
  %v532 = vadd.f32 %v189, %v531
  %v533 = vpop.f32.mrf.mxu0
  %v534 = vadd.f32 %v185, %v533
  %v535 = vpop.f32.mrf.mxu0
  %v536 = vadd.f32 %v189, %v535
  %537 = vdwg.mxu0
  %538 = vmatprep.subr.bf16.mxu0 %v419
  %539 = vmatpush1.bf16.msra.mxu0 %v418
  %540 = vmatprep.subr.bf16.mxu0 %v417
  %541 = vmatpush1.bf16.msra.mxu0 %v416
  %542 = vmatprep.subr.bf16.mxu0 %v415
  %543 = vmatpush1.bf16.msra.mxu0 %v414
  %544 = vmatprep.subr.bf16.mxu0 %v413
  %545 = vmatpush1.bf16.msra.mxu0 %v412
  %546 = vmatprep.subr.bf16.mxu0 %v411
  %547 = vmatpush1.bf16.msra.mxu0 %v410
  %548 = vmatprep.subr.bf16.mxu0 %v409
  %549 = vmatpush1.bf16.msra.mxu0 %v408
  %550 = vmatprep.subr.bf16.mxu0 %v407
  %551 = vmatpush1.bf16.msra.mxu0 %v406
  %552 = vmatprep.subr.bf16.mxu0 %v405
  %553 = vmatpush1.bf16.msra.mxu0 %v404
  %554 = vmatprep.subr.bf16.mxu0 0
  %555 = vmatpush2.bf16.msra.mxu0 0
  %556 = vmatprep.subr.bf16.mxu0 0
  %557 = vmatpush2.bf16.msra.mxu0 0
  %558 = vmatprep.subr.bf16.mxu0 %v431
  %559 = vmatpush2.bf16.msra.mxu0 %v430
  %560 = vmatprep.subr.bf16.mxu0 %v429
  %561 = vmatpush2.bf16.msra.mxu0 %v428
  %562 = vmatprep.subr.bf16.mxu0 %v427
  %563 = vmatpush2.bf16.msra.mxu0 %v426
  %564 = vmatprep.subr.bf16.mxu0 %v425
  %565 = vmatpush2.bf16.msra.mxu0 %v424
  %566 = vmatprep.subr.bf16.mxu0 %v423
  %567 = vmatpush2.bf16.msra.mxu0 %v422
  %568 = vmatprep.subr.bf16.mxu0 %v421
  %569 = vmatpush2.bf16.msra.mxu0 %v420
  %570 = vmatprep.mubr.bf16.mxu0 %v493
  %571 = vmatmul.mubr.bf16.gmra.mxu0 %v117
  %v572 = vpop.f32.mrf.mxu0
  %v573 = vadd.f32 %v530, %v572
  %v574 = vpop.f32.mrf.mxu0
  %v575 = vadd.f32 %v532, %v574
  %v576 = vpop.f32.mrf.mxu0
  %v577 = vadd.f32 %v534, %v576
  %v578 = vpop.f32.mrf.mxu0
  %v579 = vadd.f32 %v536, %v578
  %580 = vdwg.mxu0
  %v581 = vmax.f32 %v573, 0.0
  %v582 = vmax.f32 %v575, 0.0
  %v583 = vmax.f32 %v577, 0.0
  %v584 = vmax.f32 %v579, 0.0
  %v585 = vmax.f32 %v581, %v582
  %v586 = vmax.f32 %v583, %v584
  %v589 = vcombine.high %v585, %v585
  %v591 = vunpack.c.l.s4 1983009808
  %v592 = vunpack.c.0.s8 %v591
  %v593 = vlaneseq
  %v594 = vshrl.u32 %v593, 7
  %v595 = vsub.s32 %v592, %v594
  %v596 = vrot.slane %v585, %v595
  %v598 = vunpack.c.l.s4 1983009808
  %v599 = vunpack.c.0.s8 %v598
  %v600 = vlaneseq
  %v601 = vshrl.u32 %v600, 7
  %v602 = vsub.s32 %v599, %v601
  %v603 = vrot.slane %v589, %v602
  %v604 = vcombine.high %v596, %v596
  %v605 = vcombine.high %v603, %v603
  %v606 = vcombine.high %v586, %v586
  %v608 = vunpack.c.l.s4 1983009808
  %v609 = vunpack.c.0.s8 %v608
  %v610 = vlaneseq
  %v611 = vshrl.u32 %v610, 7
  %v612 = vsub.s32 %v609, %v611
  %v613 = vrot.slane %v586, %v612
  %v615 = vunpack.c.l.s4 1983009808
  %v616 = vunpack.c.0.s8 %v615
  %v617 = vlaneseq
  %v618 = vshrl.u32 %v617, 7
  %v619 = vsub.s32 %v616, %v618
  %v620 = vrot.slane %v606, %v619
  %v621 = vcombine.high %v613, %v613
  %v622 = vcombine.high %v620, %v620
  %v631 = vrot.slane %v596, 7
  %v632 = vrot.slane %v631, 2
  %v633 = vrot.slane %v604, 7
  %v634 = vrot.slane %v633, 2
  %v635 = vrot.slane %v603, 7
  %v636 = vrot.slane %v635, 2
  %v637 = vrot.slane %v605, 7
  %v638 = vrot.slane %v637, 2
  %v639 = vrot.slane %v613, 7
  %v640 = vrot.slane %v639, 2
  %v641 = vrot.slane %v621, 7
  %v642 = vrot.slane %v641, 2
  %v643 = vrot.slane %v620, 7
  %v644 = vrot.slane %v643, 2
  %v645 = vrot.slane %v622, 7
  %v646 = vrot.slane %v645, 2
  %v655 = vmax.f32 %v596, %v632
  %v656 = vmax.f32 %v604, %v634
  %v657 = vmax.f32 %v603, %v636
  %v658 = vmax.f32 %v605, %v638
  %v659 = vmax.f32 %v613, %v640
  %v660 = vmax.f32 %v621, %v642
  %v661 = vmax.f32 %v620, %v644
  %v662 = vmax.f32 %v622, %v646
  %v663 = vpack.c.bf16 %v655, %v655
  %v664 = vpack.c.bf16 %v656, %v656
  %v665 = vpack.c.bf16 %v657, %v657
  %v666 = vpack.c.bf16 %v658, %v658
  %v667 = vpack.c.bf16 %v659, %v659
  %v668 = vpack.c.bf16 %v660, %v660
  %v669 = vpack.c.bf16 %v661, %v661
  %v670 = vpack.c.bf16 %v662, %v662
  %v680 = vunpack.c.l.s4 1983009808
  %v681 = vunpack.c.0.s8 %v680
  %v682 = vlaneseq
  %v683 = vshrl.u32 %v682, 7
  %v684 = vsub.s32 %v681, %v683
  %v685 = vrot.slane %v663, %v684
  %v687 = vunpack.c.l.s4 1983009808
  %v688 = vunpack.c.0.s8 %v687
  %v689 = vlaneseq
  %v690 = vshrl.u32 %v689, 7
  %v691 = vsub.s32 %v688, %v690
  %v692 = vrot.slane %v664, %v691
  %v694 = vunpack.c.l.s4 1983009808
  %v695 = vunpack.c.0.s8 %v694
  %v696 = vlaneseq
  %v697 = vshrl.u32 %v696, 7
  %v698 = vsub.s32 %v695, %v697
  %v699 = vrot.slane %v665, %v698
  %v701 = vunpack.c.l.s4 1983009808
  %v702 = vunpack.c.0.s8 %v701
  %v703 = vlaneseq
  %v704 = vshrl.u32 %v703, 7
  %v705 = vsub.s32 %v702, %v704
  %v706 = vrot.slane %v666, %v705
  %v708 = vunpack.c.l.s4 1983009808
  %v709 = vunpack.c.0.s8 %v708
  %v710 = vlaneseq
  %v711 = vshrl.u32 %v710, 7
  %v712 = vsub.s32 %v709, %v711
  %v713 = vrot.slane %v667, %v712
  %v715 = vunpack.c.l.s4 1983009808
  %v716 = vunpack.c.0.s8 %v715
  %v717 = vlaneseq
  %v718 = vshrl.u32 %v717, 7
  %v719 = vsub.s32 %v716, %v718
  %v720 = vrot.slane %v668, %v719
  %v722 = vunpack.c.l.s4 1983009808
  %v723 = vunpack.c.0.s8 %v722
  %v724 = vlaneseq
  %v725 = vshrl.u32 %v724, 7
  %v726 = vsub.s32 %v723, %v725
  %v727 = vrot.slane %v669, %v726
  %v729 = vunpack.c.l.s4 1983009808
  %v730 = vunpack.c.0.s8 %v729
  %v731 = vlaneseq
  %v732 = vshrl.u32 %v731, 7
  %v733 = vsub.s32 %v730, %v732
  %v734 = vrot.slane %v670, %v733
  %v736 = vunpack.c.l.s4 1983009808
  %v737 = vunpack.c.0.s8 %v736
  %v738 = vlaneseq
  %v739 = vshrl.u32 %v738, 7
  %v740 = vsub.s32 %v737, %v739
  %v741 = vrot.slane %v685, %v740
  %v743 = vunpack.c.l.s4 1983009808
  %v744 = vunpack.c.0.s8 %v743
  %v745 = vlaneseq
  %v746 = vshrl.u32 %v745, 7
  %v747 = vsub.s32 %v744, %v746
  %v748 = vrot.slane %v692, %v747
  %v750 = vunpack.c.l.s4 1983009808
  %v751 = vunpack.c.0.s8 %v750
  %v752 = vlaneseq
  %v753 = vshrl.u32 %v752, 7
  %v754 = vsub.s32 %v751, %v753
  %v755 = vrot.slane %v699, %v754
  %v757 = vunpack.c.l.s4 1983009808
  %v758 = vunpack.c.0.s8 %v757
  %v759 = vlaneseq
  %v760 = vshrl.u32 %v759, 7
  %v761 = vsub.s32 %v758, %v760
  %v762 = vrot.slane %v706, %v761
  %v764 = vunpack.c.l.s4 1983009808
  %v765 = vunpack.c.0.s8 %v764
  %v766 = vlaneseq
  %v767 = vshrl.u32 %v766, 7
  %v768 = vsub.s32 %v765, %v767
  %v769 = vrot.slane %v713, %v768
  %v771 = vunpack.c.l.s4 1983009808
  %v772 = vunpack.c.0.s8 %v771
  %v773 = vlaneseq
  %v774 = vshrl.u32 %v773, 7
  %v775 = vsub.s32 %v772, %v774
  %v776 = vrot.slane %v720, %v775
  %v778 = vunpack.c.l.s4 1983009808
  %v779 = vunpack.c.0.s8 %v778
  %v780 = vlaneseq
  %v781 = vshrl.u32 %v780, 7
  %v782 = vsub.s32 %v779, %v781
  %v783 = vrot.slane %v727, %v782
  %v785 = vunpack.c.l.s4 1983009808
  %v786 = vunpack.c.0.s8 %v785
  %v787 = vlaneseq
  %v788 = vshrl.u32 %v787, 7
  %v789 = vsub.s32 %v786, %v788
  %v790 = vrot.slane %v734, %v789
  %v791 = vunpack.c.l.b16 %v741
  %v792 = vunpack.c.l.b16 %v748
  %v793 = vunpack.c.l.b16 %v755
  %v794 = vunpack.c.l.b16 %v762
  %v795 = vunpack.c.l.b16 %v769
  %v796 = vunpack.c.l.b16 %v776
  %v797 = vunpack.c.l.b16 %v783
  %v798 = vunpack.c.l.b16 %v790
  %v799 = vrot.slane %v792, 7
  %vm800 = vcmask 1041409
  %v801 = vsel %vm800, %v799, %v791
  %v802 = vrot.slane %v793, 6
  %vm803 = vcmask 1042434
  %v804 = vsel %vm803, %v802, %v801
  %v805 = vrot.slane %v794, 5
  %vm806 = vcmask 1043459
  %v807 = vsel %vm806, %v805, %v804
  %v808 = vrot.slane %v796, 7
  %v809 = vsel %vm800, %v808, %v795
  %v810 = vrot.slane %v797, 6
  %v811 = vsel %vm803, %v810, %v809
  %v812 = vrot.slane %v798, 5
  %v813 = vsel %vm806, %v812, %v811
  %v814 = vpack.c.b16 %v807, %v807
  %v815 = vpack.c.b16 %v813, %v813
  %v817 = vunpack.c.l.s4 1983009808
  %v818 = vunpack.c.0.s8 %v817
  %v819 = vlaneseq
  %v820 = vshrl.u32 %v819, 7
  %v821 = vsub.s32 %v818, %v820
  %v822 = vrot.slane %v814, %v821
  %v824 = vunpack.c.l.s4 1983009808
  %v825 = vunpack.c.0.s8 %v824
  %v826 = vlaneseq
  %v827 = vshrl.u32 %v826, 7
  %v828 = vsub.s32 %v825, %v827
  %v829 = vrot.slane %v815, %v828
  %832 = vst [vmem:[%s3] sm:$0x3] %v822
  %833 = vst [vmem:[%s3 + $0x2] sm:$0x3] %v829
  // Predicated region
  $region14: #{_lambda_.4} parent=0 // pred_check
    _
  $region15: #{_lambda_.4} parent=0 // pred_check_branch
    %835 = sbr.rel (0) target = $region17
  $region16: #{_lambda_.4} parent=0 // pred_region
    _
  $region17: #{_lambda_.4} parent=0 // pred_fallthru
    _
  // Predicated region
  $region18: #{_lambda_.4} parent=0 // pred_check
    _
  $region19: #{_lambda_.4} parent=0 // pred_check_branch
    %837 = sbr.rel (0) target = $region21
  $region20: #{_lambda_.4} parent=0 // pred_region
    _
  $region21: #{_lambda_.4} parent=0 // pred_fallthru
    _

</llo_original>
